<compile_context>
chip_gen: v6e
topology: v6e:2x2x1
jax: 0.10.0
libtpu: 0.0.40
codegen_flags: <defaults>
</compile_context>

<pallas_src>
import jax
import jax.numpy as jnp
from jax.experimental import pallas as pl
from jax.experimental.pallas import tpu as pltpu

NODES = 9     # indicators per sample (inputs.view(number * 9, 4))
IN_F = 4
LANES = 128   # lane-padded feature width for the raw inputs


# ----------------------------------------------------------- fused kernel ---

def _pdu_fused_kernel(scal_ref, x_ref, wbb_ref, wd_ref, vec_ref, gmat_ref,
                      w1e_ref, out_ref):
    rows2 = x_ref.shape[0]           # 2 * number * 9   (144)
    rows = rows2 // 2                # number * 9       (72)
    hid2 = wbb_ref.shape[1]          # 2 * hidden       (64)
    hid = hid2 // 2                  # hidden           (32)
    n_graphs = out_ref.shape[0]      # number           (8)

    # -------- packed row vectors (biases / scales), f32 ----------------------
    vec = vec_ref[...]                         # (8, 2H)
    b_bb = vec[0:1, :]                         # [online bias | target bias]
    d_b1 = vec[1:2, :]
    d_g = vec[2:3, :]
    d_beta = vec[3:4, :]
    d_b2s = vec[4:5, :]                        # dense b2, shifted to lanes [H,2H)
    predw = vec[5:6, :]                        # predictor weight row, lanes [0,H)
    m_b1 = vec[6:7, :]                         # MLP b1 (lanes [0,18))
    m_w2 = vec[7:8, :]                         # MLP w2 row (lanes [0,18))

    # -------- fused online|target backbone: ONE MXU pass over 2R rows --------
    comb = jnp.dot(x_ref[...], wbb_ref[...],
                   preferred_element_type=jnp.float32) + b_bb      # (2R, 2H)
    # lanes [0,H): online features, lanes [H,2H): target features
    # rows  [0,R): clean data,      rows  [R,2R): augmented trend

    # -------- dense_online on both branches -----------------------------------
    wd = wd_ref[...]                                               # (4H, 2H) bf16
    # d_w1 padded with zero rows for the target lanes -> no lane slice needed
    y1 = jnp.dot(comb.astype(jnp.bfloat16), wd[:hid2, :],
                 preferred_element_type=jnp.float32) + d_b1        # (2R, 2H)

    gmat = gmat_ref[...]                                           # (24, 2R) f32
    grp = gmat[:2 * n_graphs, :]                                   # (2N, 2R) 9-row groups
    red = gmat[2 * n_graphs:2 * n_graphs + 2, :]                   # (2, 2R) rows of 1/R

    # per-branch (72-row) BatchNorm stats: tiny reduction matmul + select back
    row = jax.lax.broadcasted_iota(jnp.int32, y1.shape, 0)
    is_data = row < rows
    mean2 = jnp.dot(red, y1, preferred_element_type=jnp.float32)   # (2, 2H)
    mean = jnp.where(is_data,
                     jnp.broadcast_to(mean2[0:1, :], y1.shape),
                     jnp.broadcast_to(mean2[1:2, :], y1.shape))
    cen = y1 - mean
    var2 = jnp.dot(red, cen * cen, preferred_element_type=jnp.float32)
    var = jnp.where(is_data,
                    jnp.broadcast_to(var2[0:1, :], y1.shape),
                    jnp.broadcast_to(var2[1:2, :], y1.shape))
    y1r = jnp.maximum(cen * jax.lax.rsqrt(var + 1e-5) * d_g + d_beta, 0.0)

    # second dense layer: weight columns shifted so the output lands in the
    # target-lane half [H,2H) (lanes [0,H) of `onl` stay exactly zero)
    onl = jnp.dot(y1r.astype(jnp.bfloat16), wd[hid2:, :],
                  preferred_element_type=jnp.float32) + d_b2s      # (2R, 2H)

    # -------- BYOL loss: per-graph normalize + cosine, one grouping matmul ---
    # pair (x_online, t_target) and (t_online, x_target): swap the row halves
    comb_sw = jnp.concatenate([comb[rows:, :], comb[:rows, :]], axis=0)
    lane = jax.lax.broadcasted_iota(jnp.int32, comb.shape, 1)
    tgt_sq = jnp.where(lane >= hid, comb_sw * comb_sw, 0.0)
    d = jnp.sum(onl * comb_sw, axis=1, keepdims=True)   # online lanes of onl are 0
    na = jnp.sum(onl * onl, axis=1, keepdims=True)
    nb = jnp.sum(tgt_sq, axis=1, keepdims=True)
    li3 = jax.lax.broadcasted_iota(jnp.int32, (rows2, 3), 1)
    dnn = jnp.where(li3 == 0, jnp.broadcast_to(d, (rows2, 3)),
                    jnp.where(li3 == 1, jnp.broadcast_to(na, (rows2, 3)),
                              jnp.broadcast_to(nb, (rows2, 3))))   # (2R, 3)
    g = jnp.dot(grp, dnn, preferred_element_type=jnp.float32)      # (2N, 3)
    eps = 1e-12                                                    # F.normalize eps
    cos = g[:, 0:1] / (jnp.maximum(jnp.sqrt(g[:, 1:2]), eps) *
                       jnp.maximum(jnp.sqrt(g[:, 2:3]), eps))
    loss = jnp.sum(2.0 - 2.0 * cos, axis=0, keepdims=True) * (1.0 / n_graphs)

    # -------- predictor + MLP head (view(number, 9) folded into grouping) ----
    # predictor output is 1-wide -> do it on the VPU (mult + lane reduce)
    q = jnp.sum(comb * predw, axis=1, keepdims=True) + scal_ref[0]  # (2R, 1)
    z = jnp.dot(grp[:n_graphs, :], q * w1e_ref[...],
                preferred_element_type=jnp.float32) + m_b1          # (N, 2H)
    z = jnp.where(z > 0, z, 0.01 * z)                               # LeakyReLU(0.01)
    head = jnp.sum(z * m_w2, axis=1, keepdims=True) + scal_ref[1]   # (N, 1)

    # -------- lane-dense output slab: lanes [0,64) head, [64,128) loss -------
    lane_o = jax.lax.broadcasted_iota(jnp.int32, out_ref.shape, 1)
    out_ref[...] = jnp.where(lane_o < (out_ref.shape[1] // 2),
                             jnp.broadcast_to(head, out_ref.shape),
                             jnp.broadcast_to(loss, out_ref.shape))


# --------------------------------------------------------------- wrapper ----

def _pack_operands(params, inputs, key):
    """Augment (f32, host/XLA side) and pack operands into a few dense slabs."""
    number = inputs.shape[0]
    rows = number * NODES
    rows2 = 2 * rows
    hid = params['bb_w'].shape[1]
    hid2 = 2 * hid

    data = inputs.reshape(rows, IN_F).astype(jnp.float32)

    # Gaussian noise (std=0.001) + random mask (p=0.001, NO 1/(1-p) rescale,
    # matching random_mask in the reference).  Done in f32 before any cast.
    k_noise, k_mask = jax.random.split(key)
    noise = 0.001 * jax.random.normal(k_noise, (rows, IN_F), dtype=jnp.float32)
    keep = (jax.random.uniform(k_mask, (rows, IN_F)) > 0.001).astype(jnp.float32)
    trend = (data + noise) * keep

    x_stack = jnp.concatenate([data, trend], axis=0)                 # (2R, 4)
    x_stack = jnp.pad(x_stack, ((0, 0), (0, LANES - IN_F))).astype(jnp.bfloat16)

    # fused [online | target] backbone weight, padded to 128 input lanes
    w_bb = jnp.zeros((LANES, hid2), jnp.float32)
    w_bb = w_bb.at[:IN_F, :hid].set(params['bb_w'])
    w_bb = w_bb.at[:IN_F, hid:].set(params['bbt_w'])
    w_bb = w_bb.astype(jnp.bfloat16)

    # dense_online weights in one slab:
    #   rows [0,2H)   : d_w1 padded with zero rows for the target lanes
    #   rows [2H,4H)  : d_w2 shifted into output lanes [H,2H)
    w_dense = jnp.zeros((2 * hid2, hid2), jnp.float32)
    w_dense = w_dense.at[:hid, :].set(params['d_w1'])
    w_dense = w_dense.at[hid2:, hid:].set(params['d_w2'])
    w_dense = w_dense.astype(jnp.bfloat16)

    # row-vector slab (biases / BN affine / small weights), f32
    vec = jnp.zeros((8, hid2), jnp.float32)
    vec = vec.at[0, :hid].set(params['bb_b'].reshape(-1))
    vec = vec.at[0, hid:].set(params['bbt_b'].reshape(-1))
    vec = vec.at[1, :].set(params['d_b1'].reshape(-1))
    vec = vec.at[2, :].set(params['d_g'].reshape(-1))
    vec = vec.at[3, :].set(params['d_beta'].reshape(-1))
    vec = vec.at[4, hid:].set(params['d_b2'].reshape(-1))
    vec = vec.at[5, :hid].set(params['pred_w'].reshape(-1))
    vec = vec.at[6, :18].set(params['m_b1'].reshape(-1))
    vec = vec.at[7, :18].set(params['m_w2'].reshape(-1))

    # grouping / reduction matrix slab:
    #   rows [0,2N)       : 9-row grouping matrix (per-graph sums)
    #   rows [2N,2N+2)    : per-branch averaging rows (1/R over each 72-row half)
    gid = jnp.arange(rows2) // NODES
    grp = (jnp.arange(2 * number)[:, None] == gid[None, :]).astype(jnp.float32)
    half = jnp.arange(rows2) // rows
    red = (jnp.arange(2)[:, None] == half[None, :]).astype(jnp.float32) / rows
    gh = ((2 * number + 2 + 7) // 8) * 8
    gmat = jnp.zeros((gh, rows2), jnp.float32)
    gmat = gmat.at[:2 * number, :].set(grp)
    gmat = gmat.at[2 * number:2 * number + 2, :].set(red)

    # MLP first-layer weight expanded per node row: w1e[9g+k, :18] = m_w1[k, :]
    w1e = jnp.zeros((rows2, hid2), jnp.float32)
    w1e = w1e.at[:, :18].set(jnp.tile(params['m_w1'], (2 * number, 1)))

    scalars = jnp.stack([params['pred_b'].reshape(()),
                         params['m_b2'].reshape(())]).astype(jnp.float32)

    return (scalars, x_stack, w_bb, w_dense, vec, gmat, w1e)


def pdu_forward(params, inputs, key):
    """inputs: (number, 9, 4) float32 -> (output (number, 1), loss scalar)."""
    number = inputs.shape[0]
    ops = _pack_operands(params, inputs, key)
    slab = pl.pallas_call(
        _pdu_fused_kernel,
        out_shape=jax.ShapeDtypeStruct((number, LANES), jnp.float32),
        in_specs=[pl.BlockSpec(memory_space=pltpu.MemorySpace.SMEM)]
        + [pl.BlockSpec(memory_space=pltpu.MemorySpace.VMEM)] * (len(ops) - 1),
        out_specs=pl.BlockSpec(memory_space=pltpu.MemorySpace.VMEM),
    )(*ops)
    out = slab[:, :1]                 # MLP head output, (number, 1)
    loss = slab[0, LANES // 2]        # BYOL loss scalar
    return out, loss


# ---------------------------------------------------------------- params ----

def make_params(key, hidden):
    ks = jax.random.split(key, 8)

    def init(k, shape, scale=0.1):
        return scale * jax.random.normal(k, shape, dtype=jnp.float32)

    return {
        # backbone_online / backbone_target stand-ins (4 -> hidden)
        'bb_w': init(ks[0], (IN_F, hidden)), 'bb_b': jnp.zeros((1, hidden)),
        'bbt_w': init(ks[1], (IN_F, hidden)), 'bbt_b': jnp.zeros((1, hidden)),
        # predictor stand-in (hidden -> 1)
        'pred_w': init(ks[2], (hidden, 1)), 'pred_b': jnp.zeros((1, 1)),
        # dense_online: Linear(H,2H) + BatchNorm1d(2H) + ReLU + Linear(2H,H)
        'd_w1': init(ks[3], (hidden, 2 * hidden)),
        'd_b1': jnp.zeros((1, 2 * hidden)),
        'd_g': jnp.ones((1, 2 * hidden)),
        'd_beta': jnp.zeros((1, 2 * hidden)),
        'd_w2': init(ks[4], (2 * hidden, hidden)),
        'd_b2': jnp.zeros((1, hidden)),
        # MLP(9): Linear(9,18) -> LeakyReLU -> Linear(18,1)
        'm_w1': init(ks[5], (NODES, 18)), 'm_b1': jnp.zeros((1, 18)),
        'm_w2': init(ks[6], (18, 1)), 'm_b2': jnp.zeros((1, 1)),
    }


# ------------------------------------------------------------------ main ----

if __name__ == "__main__":
    NUMBER = 8        # batch ("number" in the reference forward)
    HIDDEN = 32       # hidden_feature

    key = jax.random.PRNGKey(0)
    k_in, k_par, k_aug = jax.random.split(key, 3)

    inputs = jax.random.normal(k_in, (NUMBER, NODES, IN_F), dtype=jnp.float32)
    params = make_params(k_par, HIDDEN)

    out, loss = jax.jit(pdu_forward)(params, inputs, k_aug)
    out = jax.block_until_ready(out)
    loss = jax.block_until_ready(loss)

    assert out.shape == (NUMBER, 1)
    assert loss.shape == ()
    assert bool(jnp.all(jnp.isfinite(out))) and bool(jnp.isfinite(loss))
    print("KERNEL_OK")
</pallas_src>

<mosaic_0001>
module attributes {stable_mosaic.version = 11 : i64} {
  func.func @_pdu_fused_kernel(%arg0: memref<2xf32, #tpu.memory_space<smem>>, %arg1: memref<144x128xbf16, #tpu.memory_space<vmem>>, %arg2: memref<128x64xbf16, #tpu.memory_space<vmem>>, %arg3: memref<128x64xbf16, #tpu.memory_space<vmem>>, %arg4: memref<8x64xf32, #tpu.memory_space<vmem>>, %arg5: memref<24x144xf32, #tpu.memory_space<vmem>>, %arg6: memref<144x64xf32, #tpu.memory_space<vmem>>, %arg7: memref<8x128xf32, #tpu.memory_space<vmem>>) attributes {dimension_semantics = [], scalar_prefetch = 0 : i64, scratch_operands = 0 : i64, tpu.core_type = #tpu.core_type<tc>} {
    %c0 = arith.constant 0 : index
    %c0_0 = arith.constant 0 : index
    %0 = vector.load %arg4[%c0, %c0_0] : memref<8x64xf32, #tpu.memory_space<vmem>>, vector<8x64xf32>
    %1 = vector.extract_strided_slice %0 {offsets = [0, 0], sizes = [1, 64], strides = [1, 1]} : vector<8x64xf32> to vector<1x64xf32>
    %2 = vector.extract_strided_slice %0 {offsets = [1, 0], sizes = [1, 64], strides = [1, 1]} : vector<8x64xf32> to vector<1x64xf32>
    %3 = vector.extract_strided_slice %0 {offsets = [2, 0], sizes = [1, 64], strides = [1, 1]} : vector<8x64xf32> to vector<1x64xf32>
    %4 = vector.extract_strided_slice %0 {offsets = [3, 0], sizes = [1, 64], strides = [1, 1]} : vector<8x64xf32> to vector<1x64xf32>
    %5 = vector.extract_strided_slice %0 {offsets = [4, 0], sizes = [1, 64], strides = [1, 1]} : vector<8x64xf32> to vector<1x64xf32>
    %6 = vector.extract_strided_slice %0 {offsets = [5, 0], sizes = [1, 64], strides = [1, 1]} : vector<8x64xf32> to vector<1x64xf32>
    %7 = vector.extract_strided_slice %0 {offsets = [6, 0], sizes = [1, 64], strides = [1, 1]} : vector<8x64xf32> to vector<1x64xf32>
    %8 = vector.extract_strided_slice %0 {offsets = [7, 0], sizes = [1, 64], strides = [1, 1]} : vector<8x64xf32> to vector<1x64xf32>
    %c0_1 = arith.constant 0 : index
    %c0_2 = arith.constant 0 : index
    %9 = vector.load %arg1[%c0_1, %c0_2] : memref<144x128xbf16, #tpu.memory_space<vmem>>, vector<144x128xbf16>
    %c0_3 = arith.constant 0 : index
    %c0_4 = arith.constant 0 : index
    %10 = vector.load %arg2[%c0_3, %c0_4] : memref<128x64xbf16, #tpu.memory_space<vmem>>, vector<128x64xbf16>
    %cst = arith.constant dense<0.000000e+00> : vector<144x64xf32>
    %11 = tpu.matmul %9, %10, %cst {dimension_numbers = #tpu.dot_dimension_numbers<[1], [0], [0], [1], [0, 0, 1, 1], [], []>} : vector<144x128xbf16>, vector<128x64xbf16>, vector<144x64xf32> -> vector<144x64xf32>
    %12 = vector.broadcast %1 : vector<1x64xf32> to vector<144x64xf32>
    %13 = arith.addf %11, %12 : vector<144x64xf32>
    %c0_5 = arith.constant 0 : index
    %c0_6 = arith.constant 0 : index
    %14 = vector.load %arg3[%c0_5, %c0_6] : memref<128x64xbf16, #tpu.memory_space<vmem>>, vector<128x64xbf16>
    %15 = arith.truncf %13 : vector<144x64xf32> to vector<144x64xbf16>
    %16 = vector.extract_strided_slice %14 {offsets = [0, 0], sizes = [64, 64], strides = [1, 1]} : vector<128x64xbf16> to vector<64x64xbf16>
    %cst_7 = arith.constant dense<0.000000e+00> : vector<144x64xf32>
    %17 = tpu.matmul %15, %16, %cst_7 {dimension_numbers = #tpu.dot_dimension_numbers<[1], [0], [0], [1], [0, 0, 1, 1], [], []>} : vector<144x64xbf16>, vector<64x64xbf16>, vector<144x64xf32> -> vector<144x64xf32>
    %18 = vector.broadcast %2 : vector<1x64xf32> to vector<144x64xf32>
    %19 = arith.addf %17, %18 : vector<144x64xf32>
    %c0_8 = arith.constant 0 : index
    %c0_9 = arith.constant 0 : index
    %20 = vector.load %arg5[%c0_8, %c0_9] : memref<24x144xf32, #tpu.memory_space<vmem>>, vector<24x144xf32>
    %21 = vector.extract_strided_slice %20 {offsets = [0, 0], sizes = [16, 144], strides = [1, 1]} : vector<24x144xf32> to vector<16x144xf32>
    %22 = vector.extract_strided_slice %20 {offsets = [16, 0], sizes = [2, 144], strides = [1, 1]} : vector<24x144xf32> to vector<2x144xf32>
    %23 = tpu.iota {dimensions = array<i32: 0>} : vector<144x64xi32>
    %c72_i32 = arith.constant 72 : i32
    %24 = vector.broadcast %c72_i32 : i32 to vector<144x64xi32>
    %25 = arith.cmpi slt, %23, %24 : vector<144x64xi32>
    %cst_10 = arith.constant dense<0.000000e+00> : vector<2x64xf32>
    %26 = tpu.matmul %22, %19, %cst_10 {dimension_numbers = #tpu.dot_dimension_numbers<[1], [0], [0], [1], [0, 0, 1, 1], [], []>} : vector<2x144xf32>, vector<144x64xf32>, vector<2x64xf32> -> vector<2x64xf32>
    %27 = vector.extract_strided_slice %26 {offsets = [0, 0], sizes = [1, 64], strides = [1, 1]} : vector<2x64xf32> to vector<1x64xf32>
    %28 = vector.shape_cast %27 : vector<1x64xf32> to vector<1x64xf32>
    %29 = vector.broadcast %28 : vector<1x64xf32> to vector<144x64xf32>
    %30 = vector.extract_strided_slice %26 {offsets = [1, 0], sizes = [1, 64], strides = [1, 1]} : vector<2x64xf32> to vector<1x64xf32>
    %31 = vector.shape_cast %30 : vector<1x64xf32> to vector<1x64xf32>
    %32 = vector.broadcast %31 : vector<1x64xf32> to vector<144x64xf32>
    %33 = arith.select %25, %29, %32 : vector<144x64xi1>, vector<144x64xf32>
    %34 = arith.subf %19, %33 : vector<144x64xf32>
    %35 = arith.mulf %34, %34 : vector<144x64xf32>
    %cst_11 = arith.constant dense<0.000000e+00> : vector<2x64xf32>
    %36 = tpu.matmul %22, %35, %cst_11 {dimension_numbers = #tpu.dot_dimension_numbers<[1], [0], [0], [1], [0, 0, 1, 1], [], []>} : vector<2x144xf32>, vector<144x64xf32>, vector<2x64xf32> -> vector<2x64xf32>
    %37 = vector.extract_strided_slice %36 {offsets = [0, 0], sizes = [1, 64], strides = [1, 1]} : vector<2x64xf32> to vector<1x64xf32>
    %38 = vector.shape_cast %37 : vector<1x64xf32> to vector<1x64xf32>
    %39 = vector.broadcast %38 : vector<1x64xf32> to vector<144x64xf32>
    %40 = vector.extract_strided_slice %36 {offsets = [1, 0], sizes = [1, 64], strides = [1, 1]} : vector<2x64xf32> to vector<1x64xf32>
    %41 = vector.shape_cast %40 : vector<1x64xf32> to vector<1x64xf32>
    %42 = vector.broadcast %41 : vector<1x64xf32> to vector<144x64xf32>
    %43 = arith.select %25, %39, %42 : vector<144x64xi1>, vector<144x64xf32>
    %cst_12 = arith.constant 9.99999974E-6 : f32
    %44 = vector.broadcast %cst_12 : f32 to vector<144x64xf32>
    %45 = arith.addf %43, %44 : vector<144x64xf32>
    %46 = math.rsqrt %45 : vector<144x64xf32>
    %47 = arith.mulf %34, %46 : vector<144x64xf32>
    %48 = vector.broadcast %3 : vector<1x64xf32> to vector<144x64xf32>
    %49 = arith.mulf %47, %48 : vector<144x64xf32>
    %50 = vector.broadcast %4 : vector<1x64xf32> to vector<144x64xf32>
    %51 = arith.addf %49, %50 : vector<144x64xf32>
    %cst_13 = arith.constant 0.000000e+00 : f32
    %52 = vector.broadcast %cst_13 : f32 to vector<144x64xf32>
    %53 = arith.maximumf %51, %52 : vector<144x64xf32>
    %54 = arith.truncf %53 : vector<144x64xf32> to vector<144x64xbf16>
    %55 = vector.extract_strided_slice %14 {offsets = [64, 0], sizes = [64, 64], strides = [1, 1]} : vector<128x64xbf16> to vector<64x64xbf16>
    %cst_14 = arith.constant dense<0.000000e+00> : vector<144x64xf32>
    %56 = tpu.matmul %54, %55, %cst_14 {dimension_numbers = #tpu.dot_dimension_numbers<[1], [0], [0], [1], [0, 0, 1, 1], [], []>} : vector<144x64xbf16>, vector<64x64xbf16>, vector<144x64xf32> -> vector<144x64xf32>
    %57 = vector.broadcast %5 : vector<1x64xf32> to vector<144x64xf32>
    %58 = arith.addf %56, %57 : vector<144x64xf32>
    %59 = vector.extract_strided_slice %13 {offsets = [72, 0], sizes = [72, 64], strides = [1, 1]} : vector<144x64xf32> to vector<72x64xf32>
    %60 = vector.extract_strided_slice %13 {offsets = [0, 0], sizes = [72, 64], strides = [1, 1]} : vector<144x64xf32> to vector<72x64xf32>
    %61 = tpu.concatenate %59, %60 in 0 : vector<72x64xf32>, vector<72x64xf32> -> vector<144x64xf32>
    %62 = tpu.iota {dimensions = array<i32: 1>} : vector<144x64xi32>
    %c32_i32 = arith.constant 32 : i32
    %63 = vector.broadcast %c32_i32 : i32 to vector<144x64xi32>
    %64 = arith.cmpi sge, %62, %63 : vector<144x64xi32>
    %65 = arith.mulf %61, %61 : vector<144x64xf32>
    %cst_15 = arith.constant 0.000000e+00 : f32
    %66 = vector.broadcast %cst_15 : f32 to vector<144x64xf32>
    %67 = arith.select %64, %65, %66 : vector<144x64xi1>, vector<144x64xf32>
    %68 = arith.mulf %58, %61 : vector<144x64xf32>
    %cst_16 = arith.constant dense<0.000000e+00> : vector<144xf32>
    %69 = vector.multi_reduction <add>, %68, %cst_16 [1] : vector<144x64xf32> to vector<144xf32>
    %70 = vector.shape_cast %69 : vector<144xf32> to vector<144x1xf32>
    %71 = arith.mulf %58, %58 : vector<144x64xf32>
    %cst_17 = arith.constant dense<0.000000e+00> : vector<144xf32>
    %72 = vector.multi_reduction <add>, %71, %cst_17 [1] : vector<144x64xf32> to vector<144xf32>
    %73 = vector.shape_cast %72 : vector<144xf32> to vector<144x1xf32>
    %cst_18 = arith.constant dense<0.000000e+00> : vector<144xf32>
    %74 = vector.multi_reduction <add>, %67, %cst_18 [1] : vector<144x64xf32> to vector<144xf32>
    %75 = vector.shape_cast %74 : vector<144xf32> to vector<144x1xf32>
    %76 = tpu.iota {dimensions = array<i32: 1>} : vector<144x3xi32>
    %c0_i32 = arith.constant 0 : i32
    %77 = vector.broadcast %c0_i32 : i32 to vector<144x3xi32>
    %78 = arith.cmpi eq, %76, %77 : vector<144x3xi32>
    %79 = vector.shape_cast %70 : vector<144x1xf32> to vector<144x1xf32>
    %80 = vector.broadcast %79 : vector<144x1xf32> to vector<144x3xf32>
    %c1_i32 = arith.constant 1 : i32
    %81 = vector.broadcast %c1_i32 : i32 to vector<144x3xi32>
    %82 = arith.cmpi eq, %76, %81 : vector<144x3xi32>
    %83 = vector.shape_cast %73 : vector<144x1xf32> to vector<144x1xf32>
    %84 = vector.broadcast %83 : vector<144x1xf32> to vector<144x3xf32>
    %85 = vector.shape_cast %75 : vector<144x1xf32> to vector<144x1xf32>
    %86 = vector.broadcast %85 : vector<144x1xf32> to vector<144x3xf32>
    %87 = arith.select %82, %84, %86 : vector<144x3xi1>, vector<144x3xf32>
    %88 = arith.select %78, %80, %87 : vector<144x3xi1>, vector<144x3xf32>
    %cst_19 = arith.constant dense<0.000000e+00> : vector<16x3xf32>
    %89 = tpu.matmul %21, %88, %cst_19 {dimension_numbers = #tpu.dot_dimension_numbers<[1], [0], [0], [1], [0, 0, 1, 1], [], []>} : vector<16x144xf32>, vector<144x3xf32>, vector<16x3xf32> -> vector<16x3xf32>
    %90 = vector.extract_strided_slice %89 {offsets = [0, 0], sizes = [16, 1], strides = [1, 1]} : vector<16x3xf32> to vector<16x1xf32>
    %91 = vector.extract_strided_slice %89 {offsets = [0, 1], sizes = [16, 1], strides = [1, 1]} : vector<16x3xf32> to vector<16x1xf32>
    %92 = math.sqrt %91 : vector<16x1xf32>
    %cst_20 = arith.constant 9.99999996E-13 : f32
    %93 = vector.broadcast %cst_20 : f32 to vector<16x1xf32>
    %94 = arith.maximumf %92, %93 : vector<16x1xf32>
    %95 = vector.extract_strided_slice %89 {offsets = [0, 2], sizes = [16, 1], strides = [1, 1]} : vector<16x3xf32> to vector<16x1xf32>
    %96 = math.sqrt %95 : vector<16x1xf32>
    %cst_21 = arith.constant 9.99999996E-13 : f32
    %97 = vector.broadcast %cst_21 : f32 to vector<16x1xf32>
    %98 = arith.maximumf %96, %97 : vector<16x1xf32>
    %99 = arith.mulf %94, %98 : vector<16x1xf32>
    %100 = arith.divf %90, %99 : vector<16x1xf32>
    %cst_22 = arith.constant 2.000000e+00 : f32
    %101 = vector.broadcast %cst_22 : f32 to vector<16x1xf32>
    %102 = arith.mulf %101, %100 : vector<16x1xf32>
    %cst_23 = arith.constant 2.000000e+00 : f32
    %103 = vector.broadcast %cst_23 : f32 to vector<16x1xf32>
    %104 = arith.subf %103, %102 : vector<16x1xf32>
    %cst_24 = arith.constant dense<0.000000e+00> : vector<1xf32>
    %105 = vector.multi_reduction <add>, %104, %cst_24 [0] : vector<16x1xf32> to vector<1xf32>
    %106 = vector.shape_cast %105 : vector<1xf32> to vector<1x1xf32>
    %cst_25 = arith.constant 1.250000e-01 : f32
    %107 = vector.broadcast %cst_25 : f32 to vector<1x1xf32>
    %108 = arith.mulf %106, %107 : vector<1x1xf32>
    %109 = vector.broadcast %6 : vector<1x64xf32> to vector<144x64xf32>
    %110 = arith.mulf %13, %109 : vector<144x64xf32>
    %cst_26 = arith.constant dense<0.000000e+00> : vector<144xf32>
    %111 = vector.multi_reduction <add>, %110, %cst_26 [1] : vector<144x64xf32> to vector<144xf32>
    %112 = vector.shape_cast %111 : vector<144xf32> to vector<144x1xf32>
    %c0_27 = arith.constant 0 : index
    %113 = memref.load %arg0[%c0_27] : memref<2xf32, #tpu.memory_space<smem>>
    %114 = vector.broadcast %113 : f32 to vector<144x1xf32>
    %115 = arith.addf %112, %114 : vector<144x1xf32>
    %116 = vector.extract_strided_slice %21 {offsets = [0, 0], sizes = [8, 144], strides = [1, 1]} : vector<16x144xf32> to vector<8x144xf32>
    %c0_28 = arith.constant 0 : index
    %c0_29 = arith.constant 0 : index
    %117 = vector.load %arg6[%c0_28, %c0_29] : memref<144x64xf32, #tpu.memory_space<vmem>>, vector<144x64xf32>
    %118 = vector.broadcast %115 : vector<144x1xf32> to vector<144x64xf32>
    %119 = arith.mulf %118, %117 : vector<144x64xf32>
    %cst_30 = arith.constant dense<0.000000e+00> : vector<8x64xf32>
    %120 = tpu.matmul %116, %119, %cst_30 {dimension_numbers = #tpu.dot_dimension_numbers<[1], [0], [0], [1], [0, 0, 1, 1], [], []>} : vector<8x144xf32>, vector<144x64xf32>, vector<8x64xf32> -> vector<8x64xf32>
    %121 = vector.broadcast %7 : vector<1x64xf32> to vector<8x64xf32>
    %122 = arith.addf %120, %121 : vector<8x64xf32>
    %cst_31 = arith.constant 0.000000e+00 : f32
    %123 = vector.broadcast %cst_31 : f32 to vector<8x64xf32>
    %124 = arith.cmpf ogt, %122, %123 : vector<8x64xf32>
    %cst_32 = arith.constant 0.00999999977 : f32
    %125 = vector.broadcast %cst_32 : f32 to vector<8x64xf32>
    %126 = arith.mulf %125, %122 : vector<8x64xf32>
    %127 = arith.select %124, %122, %126 : vector<8x64xi1>, vector<8x64xf32>
    %128 = vector.broadcast %8 : vector<1x64xf32> to vector<8x64xf32>
    %129 = arith.mulf %127, %128 : vector<8x64xf32>
    %cst_33 = arith.constant dense<0.000000e+00> : vector<8xf32>
    %130 = vector.multi_reduction <add>, %129, %cst_33 [1] : vector<8x64xf32> to vector<8xf32>
    %131 = vector.shape_cast %130 : vector<8xf32> to vector<8x1xf32>
    %c1 = arith.constant 1 : index
    %132 = memref.load %arg0[%c1] : memref<2xf32, #tpu.memory_space<smem>>
    %133 = vector.broadcast %132 : f32 to vector<8x1xf32>
    %134 = arith.addf %131, %133 : vector<8x1xf32>
    %135 = tpu.iota {dimensions = array<i32: 1>} : vector<8x128xi32>
    %c64_i32 = arith.constant 64 : i32
    %136 = vector.broadcast %c64_i32 : i32 to vector<8x128xi32>
    %137 = arith.cmpi slt, %135, %136 : vector<8x128xi32>
    %138 = vector.shape_cast %134 : vector<8x1xf32> to vector<8x1xf32>
    %139 = vector.broadcast %138 : vector<8x1xf32> to vector<8x128xf32>
    %140 = vector.shape_cast %108 : vector<1x1xf32> to vector<1x1xf32>
    %141 = vector.broadcast %140 : vector<1x1xf32> to vector<8x128xf32>
    %142 = arith.select %137, %139, %141 : vector<8x128xi1>, vector<8x128xf32>
    %c0_34 = arith.constant 0 : index
    %c0_35 = arith.constant 0 : index
    %143 = vector.load %arg7[%c0_34, %c0_35] : memref<8x128xf32, #tpu.memory_space<vmem>>, vector<8x128xf32>
    tpu.vector_store %arg7[%c0_34, %c0_35], %142 {strides = array<i32>} : memref<8x128xf32, #tpu.memory_space<vmem>>, vector<8x128xf32>,
    return
  }
}

</mosaic_0001>

<llo_original>
// kernel: pdu_forward.1
$region0: #{pdu_forward.1}
  #allocation0 [shape = 'u32[]', space=smem, size = 0x4, offset = 0x4, fixed_abs, tag = 'smem constant byte address 0x4 - core index']
  #allocation1 [shape = 'u32[144,128]{1,0:T(1,128)}', space=vmem, size = 0x12000, scoped, tag = 'internal scratch']
  %s0 = inlined_call_operand.vmem [shape: f32[2], index: 0, kind: input, shape index: {}]
  %s1 = inlined_call_operand.vmem [shape: bf16[144,128], index: 1, kind: input, shape index: {}]
  %s2 = inlined_call_operand.vmem [shape: bf16[128,64], index: 2, kind: input, shape index: {}]
  %s3 = inlined_call_operand.vmem [shape: bf16[128,64], index: 3, kind: input, shape index: {}]
  %s4 = inlined_call_operand.vmem [shape: f32[8,64], index: 4, kind: input, shape index: {}]
  %s5 = inlined_call_operand.vmem [shape: f32[24,144], index: 5, kind: input, shape index: {}]
  %s6 = inlined_call_operand.vmem [shape: f32[144,64], index: 6, kind: input, shape index: {}]
  %s7 = inlined_call_operand.vmem [shape: f32[8,128], index: 7, kind: output, shape index: {}]
  %s8 = sld [smem:[#allocation0]]
  $region42: #{pdu_forward.1} parent=0
    _
  %s10 = ssub.s32 1, %s8
  %s11 = scalar_select 0, %s10, %s8
  $region1: #{pdu_forward.1} parent=0
    #allocation2 [shape = 'u8[512]{0}', space=smem, size = 0x200, scoped, tag = 'input window, operand 0, single buffered']
    #allocation3 [shape = 's32[1]{0}', space=sflag, size = 0x4, scoped, tag = 'scoped memory for pdu_forward.1']
    %12 = vsyncpa [#allocation3], 0
    // Predicated region
    $region2: #{pdu_forward.1} parent=1 // pred_check
      _
    $region3: #{pdu_forward.1} parent=1 // pred_check_branch
      %14 = sbr.rel (0) target = $region5
    $region4: #{pdu_forward.1} parent=1 // pred_region
      %s16 = ssub.s32 16, 16
      %17 = vsyncadd [#allocation3], %s16
      %s19 = sshll.u32 %s0, 4
      %s20 = int_to_ptr.vmem [resolvable:$true] %s19
      %22 = dma.vmem_to_smem %s20, 16, [#allocation2], [#allocation3]
    $region5: #{pdu_forward.1} parent=1 // pred_fallthru
      _
    // Predicated region
    $region6: #{pdu_forward.1} parent=1 // pred_check
      _
    $region7: #{pdu_forward.1} parent=1 // pred_check_branch
      %24 = sbr.rel (0) target = $region9
    $region8: #{pdu_forward.1} parent=1 // pred_region
      _
    $region9: #{pdu_forward.1} parent=1 // pred_fallthru
      _
    // Predicated region
    $region10: #{pdu_forward.1} parent=1 // pred_check
      _
    $region11: #{pdu_forward.1} parent=1 // pred_check_branch
      %26 = sbr.rel (0) target = $region13
    $region12: #{pdu_forward.1} parent=1 // pred_region
      _
    $region13: #{pdu_forward.1} parent=1 // pred_fallthru
      _
    // Predicated region
    $region14: #{pdu_forward.1} parent=1 // pred_check
      _
    $region15: #{pdu_forward.1} parent=1 // pred_check_branch
      %28 = sbr.rel (0) target = $region17
    $region16: #{pdu_forward.1} parent=1 // pred_region
      _
    $region17: #{pdu_forward.1} parent=1 // pred_fallthru
      _
    // Predicated region
    $region18: #{pdu_forward.1} parent=1 // pred_check
      _
    $region19: #{pdu_forward.1} parent=1 // pred_check_branch
      %30 = sbr.rel (0) target = $region21
    $region20: #{pdu_forward.1} parent=1 // pred_region
      _
    $region21: #{pdu_forward.1} parent=1 // pred_fallthru
      _
    // Predicated region
    $region22: #{pdu_forward.1} parent=1 // pred_check
      _
    $region23: #{pdu_forward.1} parent=1 // pred_check_branch
      %32 = sbr.rel (0) target = $region25
    $region24: #{pdu_forward.1} parent=1 // pred_region
      _
    $region25: #{pdu_forward.1} parent=1 // pred_fallthru
      _
    // Predicated region
    $region26: #{pdu_forward.1} parent=1 // pred_check
      _
    $region27: #{pdu_forward.1} parent=1 // pred_check_branch
      %34 = sbr.rel (0) target = $region29
    $region28: #{pdu_forward.1} parent=1 // pred_region
      _
    $region29: #{pdu_forward.1} parent=1 // pred_fallthru
      _
    // Predicated region
    $region30: #{pdu_forward.1} parent=1 // pred_check
      _
    $region31: #{pdu_forward.1} parent=1 // pred_check_branch
      %36 = sbr.rel (0) target = $region33
    $region32: #{pdu_forward.1} parent=1 // pred_region
      %37 = dma.done [#allocation3], 16
    $region33: #{pdu_forward.1} parent=1 // pred_fallthru
      _
    %38 = sfence
    %v40 = vld [vmem:[%s4] sm:$0xff]
    %v41 = vld [vmem:[%s1] sm:$0xf]
    %v42 = vld [vmem:[%s1 + $0x4] sm:$0xf]
    %v43 = vld [vmem:[%s1 + $0x8] sm:$0xf]
    %v44 = vld [vmem:[%s1 + $0xc] sm:$0xf]
    %v45 = vld [vmem:[%s1 + $0x10] sm:$0xf]
    %v46 = vld [vmem:[%s1 + $0x14] sm:$0xf]
    %v47 = vld [vmem:[%s1 + $0x18] sm:$0xf]
    %v48 = vld [vmem:[%s1 + $0x1c] sm:$0xf]
    %v49 = vld [vmem:[%s1 + $0x20] sm:$0xf]
    %v50 = vld [vmem:[%s1 + $0x24] sm:$0xf]
    %v51 = vld [vmem:[%s1 + $0x28] sm:$0xf]
    %v52 = vld [vmem:[%s1 + $0x2c] sm:$0xf]
    %v53 = vld [vmem:[%s1 + $0x30] sm:$0xf]
    %v54 = vld [vmem:[%s1 + $0x34] sm:$0xf]
    %v55 = vld [vmem:[%s1 + $0x38] sm:$0xf]
    %v56 = vld [vmem:[%s1 + $0x3c] sm:$0xf]
    %v57 = vld [vmem:[%s1 + $0x40] sm:$0xf]
    %v58 = vld [vmem:[%s1 + $0x44] sm:$0xf]
    %v59 = vld [vmem:[%s2] sm:$0xf]
    %v60 = vld [vmem:[%s2 + $0x4] sm:$0xf]
    %v61 = vld [vmem:[%s2 + $0x8] sm:$0xf]
    %v62 = vld [vmem:[%s2 + $0xc] sm:$0xf]
    %v63 = vld [vmem:[%s2 + $0x10] sm:$0xf]
    %v64 = vld [vmem:[%s2 + $0x14] sm:$0xf]
    %v65 = vld [vmem:[%s2 + $0x18] sm:$0xf]
    %v66 = vld [vmem:[%s2 + $0x1c] sm:$0xf]
    %v67 = vld [vmem:[%s2 + $0x20] sm:$0xf]
    %v68 = vld [vmem:[%s2 + $0x24] sm:$0xf]
    %v69 = vld [vmem:[%s2 + $0x28] sm:$0xf]
    %v70 = vld [vmem:[%s2 + $0x2c] sm:$0xf]
    %v71 = vld [vmem:[%s2 + $0x30] sm:$0xf]
    %v72 = vld [vmem:[%s2 + $0x34] sm:$0xf]
    %v73 = vld [vmem:[%s2 + $0x38] sm:$0xf]
    %v74 = vld [vmem:[%s2 + $0x3c] sm:$0xf]
    %v75 = vlaneseq
    %v76 = vshrl.u32 %v75, 7
    %v77 = vsub.s32 0, %v76
    %v78 = vrot.slane %v40, %v77
    %v97 = vunpack.c.l.b16 %v41
    %v98 = vunpack.c.l.b16 %v42
    %v99 = vunpack.c.l.b16 %v43
    %v100 = vunpack.c.l.b16 %v44
    %v101 = vunpack.c.l.b16 %v45
    %v102 = vunpack.c.l.b16 %v46
    %v103 = vunpack.c.l.b16 %v47
    %v104 = vunpack.c.l.b16 %v48
    %v105 = vunpack.c.l.b16 %v49
    %v106 = vunpack.c.l.b16 %v50
    %v107 = vunpack.c.l.b16 %v51
    %v108 = vunpack.c.l.b16 %v52
    %v109 = vunpack.c.l.b16 %v53
    %v110 = vunpack.c.l.b16 %v54
    %v111 = vunpack.c.l.b16 %v55
    %v112 = vunpack.c.l.b16 %v56
    %v113 = vunpack.c.l.b16 %v57
    %v114 = vunpack.c.l.b16 %v58
    %v115 = vpack.c.b16 %v98, %v97
    %v116 = vpack.c.b16 %v100, %v99
    %v117 = vpack.c.b16 %v102, %v101
    %v118 = vpack.c.b16 %v104, %v103
    %v119 = vpack.c.b16 %v106, %v105
    %v120 = vpack.c.b16 %v108, %v107
    %v121 = vpack.c.b16 %v110, %v109
    %v122 = vpack.c.b16 %v112, %v111
    %v123 = vpack.c.b16 %v114, %v113
    %v149 = vunpack.c.l.b16 %v59
    %v150 = vunpack.c.l.b16 %v60
    %v151 = vunpack.c.l.b16 %v61
    %v152 = vunpack.c.l.b16 %v62
    %v153 = vunpack.c.l.b16 %v63
    %v154 = vunpack.c.l.b16 %v64
    %v155 = vunpack.c.l.b16 %v65
    %v156 = vunpack.c.l.b16 %v66
    %v157 = vunpack.c.l.b16 %v67
    %v158 = vunpack.c.l.b16 %v68
    %v159 = vunpack.c.l.b16 %v69
    %v160 = vunpack.c.l.b16 %v70
    %v161 = vunpack.c.l.b16 %v71
    %v162 = vunpack.c.l.b16 %v72
    %v163 = vunpack.c.l.b16 %v73
    %v164 = vunpack.c.l.b16 %v74
    %v165 = vpack.c.b16 %v150, %v149
    %v166 = vpack.c.b16 %v152, %v151
    %v167 = vpack.c.b16 %v154, %v153
    %v168 = vpack.c.b16 %v156, %v155
    %v169 = vpack.c.b16 %v158, %v157
    %v170 = vpack.c.b16 %v160, %v159
    %v171 = vpack.c.b16 %v162, %v161
    %v172 = vpack.c.b16 %v164, %v163
    %181 = vmatprep.subr.bf16.mxu0 0
    %182 = vmatpush1.bf16.msra.mxu0 %v172
    %183 = vmatprep.subr.bf16.mxu0 0
    %184 = vmatpush1.bf16.msra.mxu0 %v171
    %185 = vmatprep.subr.bf16.mxu0 0
    %186 = vmatpush1.bf16.msra.mxu0 %v170
    %187 = vmatprep.subr.bf16.mxu0 0
    %188 = vmatpush1.bf16.msra.mxu0 %v169
    %189 = vmatprep.subr.bf16.mxu0 0
    %190 = vmatpush1.bf16.msra.mxu0 %v168
    %191 = vmatprep.subr.bf16.mxu0 0
    %192 = vmatpush1.bf16.msra.mxu0 %v167
    %193 = vmatprep.subr.bf16.mxu0 0
    %194 = vmatpush1.bf16.msra.mxu0 %v166
    %195 = vmatprep.subr.bf16.mxu0 0
    %196 = vmatpush1.bf16.msra.mxu0 %v165
    %197 = vmatprep.subr.bf16.mxu0 0
    %198 = vmatpush2.bf16.msra.mxu0 0
    %199 = vmatprep.subr.bf16.mxu0 0
    %200 = vmatpush2.bf16.msra.mxu0 0
    %201 = vmatprep.subr.bf16.mxu0 0
    %202 = vmatpush2.bf16.msra.mxu0 0
    %203 = vmatprep.subr.bf16.mxu0 0
    %204 = vmatpush2.bf16.msra.mxu0 0
    %205 = vmatprep.subr.bf16.mxu0 0
    %206 = vmatpush2.bf16.msra.mxu0 0
    %207 = vmatprep.subr.bf16.mxu0 0
    %208 = vmatpush2.bf16.msra.mxu0 0
    %209 = vmatprep.subr.bf16.mxu0 0
    %210 = vmatpush2.bf16.msra.mxu0 0
    %211 = vmatprep.subr.bf16.mxu0 0
    %212 = vmatpush2.bf16.msra.mxu0 0
    %213 = vmatprep.mubr.bf16.mxu0 0
    %214 = vmatmul.mubr.bf16.gmra.mxu0 %v115
    %v215 = vpop.f32.mrf.mxu0
    %v216 = vadd.f32 %v78, %v215
    %v217 = vpop.f32.mrf.mxu0
    %v218 = vpop.f32.mrf.mxu0
    %v219 = vadd.f32 %v78, %v218
    %v220 = vpop.f32.mrf.mxu0
    %221 = vmatprep.mubr.bf16.mxu0 0
    %222 = vmatmul.mubr.bf16.gmra.mxu0 %v116
    %v223 = vpop.f32.mrf.mxu0
    %v224 = vadd.f32 %v78, %v223
    %v225 = vpop.f32.mrf.mxu0
    %v226 = vpop.f32.mrf.mxu0
    %v227 = vadd.f32 %v78, %v226
    %v228 = vpop.f32.mrf.mxu0
    %229 = vmatprep.mubr.bf16.mxu0 0
    %230 = vmatmul.mubr.bf16.gmra.mxu0 %v117
    %v231 = vpop.f32.mrf.mxu0
    %v232 = vadd.f32 %v78, %v231
    %v233 = vpop.f32.mrf.mxu0
    %v234 = vpop.f32.mrf.mxu0
    %v235 = vadd.f32 %v78, %v234
    %v236 = vpop.f32.mrf.mxu0
    %237 = vmatprep.mubr.bf16.mxu0 0
    %238 = vmatmul.mubr.bf16.gmra.mxu0 %v118
    %v239 = vpop.f32.mrf.mxu0
    %v240 = vadd.f32 %v78, %v239
    %v241 = vpop.f32.mrf.mxu0
    %v242 = vpop.f32.mrf.mxu0
    %v243 = vadd.f32 %v78, %v242
    %v244 = vpop.f32.mrf.mxu0
    %245 = vmatprep.mubr.bf16.mxu0 0
    %246 = vmatmul.mubr.bf16.gmra.mxu0 %v119
    %v247 = vpop.f32.mrf.mxu0
    %v248 = vadd.f32 %v78, %v247
    %v249 = vpop.f32.mrf.mxu0
    %v250 = vpop.f32.mrf.mxu0
    %v251 = vadd.f32 %v78, %v250
    %v252 = vpop.f32.mrf.mxu0
    %253 = vmatprep.mubr.bf16.mxu0 0
    %254 = vmatmul.mubr.bf16.gmra.mxu0 %v120
    %v255 = vpop.f32.mrf.mxu0
    %v256 = vadd.f32 %v78, %v255
    %v257 = vpop.f32.mrf.mxu0
    %v258 = vpop.f32.mrf.mxu0
    %v259 = vadd.f32 %v78, %v258
    %v260 = vpop.f32.mrf.mxu0
    %261 = vmatprep.mubr.bf16.mxu0 0
    %262 = vmatmul.mubr.bf16.gmra.mxu0 %v121
    %v263 = vpop.f32.mrf.mxu0
    %v264 = vadd.f32 %v78, %v263
    %v265 = vpop.f32.mrf.mxu0
    %v266 = vpop.f32.mrf.mxu0
    %v267 = vadd.f32 %v78, %v266
    %v268 = vpop.f32.mrf.mxu0
    %269 = vmatprep.mubr.bf16.mxu0 0
    %270 = vmatmul.mubr.bf16.gmra.mxu0 %v122
    %v271 = vpop.f32.mrf.mxu0
    %v272 = vadd.f32 %v78, %v271
    %v273 = vpop.f32.mrf.mxu0
    %v274 = vpop.f32.mrf.mxu0
    %v275 = vadd.f32 %v78, %v274
    %v276 = vpop.f32.mrf.mxu0
    %277 = vmatprep.mubr.bf16.mxu0 0
    %278 = vmatmul.mubr.bf16.gmra.mxu0 %v123
    %v279 = vpop.f32.mrf.mxu0
    %v280 = vadd.f32 %v78, %v279
    %v281 = vpop.f32.mrf.mxu0
    %v282 = vpop.f32.mrf.mxu0
    %v283 = vadd.f32 %v78, %v282
    %v284 = vpop.f32.mrf.mxu0
    %285 = vdwg.mxu0
    %v286 = vld [vmem:[%s3] sm:$0xf]
    %v287 = vld [vmem:[%s3 + $0x4] sm:$0xf]
    %v288 = vld [vmem:[%s3 + $0x8] sm:$0xf]
    %v289 = vld [vmem:[%s3 + $0xc] sm:$0xf]
    %v290 = vld [vmem:[%s3 + $0x10] sm:$0xf]
    %v291 = vld [vmem:[%s3 + $0x14] sm:$0xf]
    %v292 = vld [vmem:[%s3 + $0x18] sm:$0xf]
    %v293 = vld [vmem:[%s3 + $0x1c] sm:$0xf]
    %v294 = vld [vmem:[%s3 + $0x20] sm:$0xf]
    %v295 = vld [vmem:[%s3 + $0x24] sm:$0xf]
    %v296 = vld [vmem:[%s3 + $0x28] sm:$0xf]
    %v297 = vld [vmem:[%s3 + $0x2c] sm:$0xf]
    %v298 = vld [vmem:[%s3 + $0x30] sm:$0xf]
    %v299 = vld [vmem:[%s3 + $0x34] sm:$0xf]
    %v300 = vld [vmem:[%s3 + $0x38] sm:$0xf]
    %v301 = vld [vmem:[%s3 + $0x3c] sm:$0xf]
    %v302 = vpack.c.bf16 %v219, %v216
    %v303 = vpack.c.bf16 %v227, %v224
    %v304 = vpack.c.bf16 %v235, %v232
    %v305 = vpack.c.bf16 %v243, %v240
    %v306 = vpack.c.bf16 %v251, %v248
    %v307 = vpack.c.bf16 %v259, %v256
    %v308 = vpack.c.bf16 %v267, %v264
    %v309 = vpack.c.bf16 %v275, %v272
    %v310 = vpack.c.bf16 %v283, %v280
    %v311 = vlaneseq
    %v312 = vshrl.u32 %v311, 7
    %v313 = vsub.s32 1, %v312
    %v314 = vrot.slane %v40, %v313
    %v323 = vunpack.c.l.b16 %v286
    %v324 = vunpack.c.l.b16 %v287
    %v325 = vunpack.c.l.b16 %v288
    %v326 = vunpack.c.l.b16 %v289
    %v327 = vunpack.c.l.b16 %v290
    %v328 = vunpack.c.l.b16 %v291
    %v329 = vunpack.c.l.b16 %v292
    %v330 = vunpack.c.l.b16 %v293
    %v331 = vpack.c.b16 %v324, %v323
    %v332 = vpack.c.b16 %v326, %v325
    %v333 = vpack.c.b16 %v328, %v327
    %v334 = vpack.c.b16 %v330, %v329
    %vm339 = vcmask 523264
    %v341 = vsel %vm339, %v302, 0
    %v344 = vsel %vm339, %v303, 0
    %v347 = vsel %vm339, %v304, 0
    %v350 = vsel %vm339, %v305, 0
    %v353 = vsel %vm339, %v306, 0
    %v356 = vsel %vm339, %v307, 0
    %v359 = vsel %vm339, %v308, 0
    %v362 = vsel %vm339, %v309, 0
    %v365 = vsel %vm339, %v310, 0
    %367 = vmatprep.subr.bf16.mxu0 0
    %368 = vmatpush1.bf16.msra.mxu0 0
    %369 = vmatprep.subr.bf16.mxu0 0
    %370 = vmatpush1.bf16.msra.mxu0 0
    %371 = vmatprep.subr.bf16.mxu0 0
    %372 = vmatpush1.bf16.msra.mxu0 0
    %373 = vmatprep.subr.bf16.mxu0 0
    %374 = vmatpush1.bf16.msra.mxu0 0
    %375 = vmatprep.subr.bf16.mxu0 0
    %376 = vmatpush1.bf16.msra.mxu0 %v334
    %377 = vmatprep.subr.bf16.mxu0 0
    %378 = vmatpush1.bf16.msra.mxu0 %v333
    %379 = vmatprep.subr.bf16.mxu0 0
    %380 = vmatpush1.bf16.msra.mxu0 %v332
    %381 = vmatprep.subr.bf16.mxu0 0
    %382 = vmatpush1.bf16.msra.mxu0 %v331
    %383 = vmatprep.subr.bf16.mxu0 0
    %384 = vmatpush2.bf16.msra.mxu0 0
    %385 = vmatprep.subr.bf16.mxu0 0
    %386 = vmatpush2.bf16.msra.mxu0 0
    %387 = vmatprep.subr.bf16.mxu0 0
    %388 = vmatpush2.bf16.msra.mxu0 0
    %389 = vmatprep.subr.bf16.mxu0 0
    %390 = vmatpush2.bf16.msra.mxu0 0
    %391 = vmatprep.subr.bf16.mxu0 0
    %392 = vmatpush2.bf16.msra.mxu0 0
    %393 = vmatprep.subr.bf16.mxu0 0
    %394 = vmatpush2.bf16.msra.mxu0 0
    %395 = vmatprep.subr.bf16.mxu0 0
    %396 = vmatpush2.bf16.msra.mxu0 0
    %397 = vmatprep.subr.bf16.mxu0 0
    %398 = vmatpush2.bf16.msra.mxu0 0
    %399 = vmatprep.mubr.bf16.mxu0 0
    %400 = vmatmul.mubr.bf16.gmra.mxu0 %v341
    %v401 = vpop.f32.mrf.mxu0
    %v402 = vadd.f32 %v314, %v401
    %v403 = vpop.f32.mrf.mxu0
    %v404 = vpop.f32.mrf.mxu0
    %v405 = vadd.f32 %v314, %v404
    %v406 = vpop.f32.mrf.mxu0
    %407 = vmatprep.mubr.bf16.mxu0 0
    %408 = vmatmul.mubr.bf16.gmra.mxu0 %v344
    %v409 = vpop.f32.mrf.mxu0
    %v410 = vadd.f32 %v314, %v409
    %v411 = vpop.f32.mrf.mxu0
    %v412 = vpop.f32.mrf.mxu0
    %v413 = vadd.f32 %v314, %v412
    %v414 = vpop.f32.mrf.mxu0
    %415 = vmatprep.mubr.bf16.mxu0 0
    %416 = vmatmul.mubr.bf16.gmra.mxu0 %v347
    %v417 = vpop.f32.mrf.mxu0
    %v418 = vadd.f32 %v314, %v417
    %v419 = vpop.f32.mrf.mxu0
    %v420 = vpop.f32.mrf.mxu0
    %v421 = vadd.f32 %v314, %v420
    %v422 = vpop.f32.mrf.mxu0
    %423 = vmatprep.mubr.bf16.mxu0 0
    %424 = vmatmul.mubr.bf16.gmra.mxu0 %v350
    %v425 = vpop.f32.mrf.mxu0
    %v426 = vadd.f32 %v314, %v425
    %v427 = vpop.f32.mrf.mxu0
    %v428 = vpop.f32.mrf.mxu0
    %v429 = vadd.f32 %v314, %v428
    %v430 = vpop.f32.mrf.mxu0
    %431 = vmatprep.mubr.bf16.mxu0 0
    %432 = vmatmul.mubr.bf16.gmra.mxu0 %v353
    %v433 = vpop.f32.mrf.mxu0
    %v434 = vadd.f32 %v314, %v433
    %v435 = vpop.f32.mrf.mxu0
    %v436 = vpop.f32.mrf.mxu0
    %v437 = vadd.f32 %v314, %v436
    %v438 = vpop.f32.mrf.mxu0
    %439 = vmatprep.mubr.bf16.mxu0 0
    %440 = vmatmul.mubr.bf16.gmra.mxu0 %v356
    %v441 = vpop.f32.mrf.mxu0
    %v442 = vadd.f32 %v314, %v441
    %v443 = vpop.f32.mrf.mxu0
    %v444 = vpop.f32.mrf.mxu0
    %v445 = vadd.f32 %v314, %v444
    %v446 = vpop.f32.mrf.mxu0
    %447 = vmatprep.mubr.bf16.mxu0 0
    %448 = vmatmul.mubr.bf16.gmra.mxu0 %v359
    %v449 = vpop.f32.mrf.mxu0
    %v450 = vadd.f32 %v314, %v449
    %v451 = vpop.f32.mrf.mxu0
    %v452 = vpop.f32.mrf.mxu0
    %v453 = vadd.f32 %v314, %v452
    %v454 = vpop.f32.mrf.mxu0
    %455 = vmatprep.mubr.bf16.mxu0 0
    %456 = vmatmul.mubr.bf16.gmra.mxu0 %v362
    %v457 = vpop.f32.mrf.mxu0
    %v458 = vadd.f32 %v314, %v457
    %v459 = vpop.f32.mrf.mxu0
    %v460 = vpop.f32.mrf.mxu0
    %v461 = vadd.f32 %v314, %v460
    %v462 = vpop.f32.mrf.mxu0
    %463 = vmatprep.mubr.bf16.mxu0 0
    %464 = vmatmul.mubr.bf16.gmra.mxu0 %v365
    %v465 = vpop.f32.mrf.mxu0
    %v466 = vadd.f32 %v314, %v465
    %v467 = vpop.f32.mrf.mxu0
    %v468 = vpop.f32.mrf.mxu0
    %v469 = vadd.f32 %v314, %v468
    %v470 = vpop.f32.mrf.mxu0
    %471 = vdwg.mxu0
    %v472 = vld [vmem:[%s5] sm:$0xff]
    %v473 = vld [vmem:[%s5 + $0x8] sm:$0xff]
    %v474 = vld [vmem:[%s5 + $0x10] sm:$0xff]
    %v475 = vld [vmem:[%s5 + $0x18] sm:$0xff]
    %v476 = vld [vmem:[%s5 + $0x20] sm:$0xff]
    %v477 = vld [vmem:[%s5 + $0x28] sm:$0xff]
    %v478 = vlaneseq
    %v479 = vshrl.u32 %v478, 7
    %v480 = vadd.s32 %v479, 8
    %v481 = vadd.s32 %v479, 16
    %v482 = vadd.s32 %v479, 24
    %v483 = vadd.s32 %v479, 32
    %v484 = vadd.s32 %v479, 40
    %v485 = vadd.s32 %v479, 48
    %v486 = vadd.s32 %v479, 56
    %v487 = vadd.s32 %v479, 64
    %v488 = vadd.s32 %v479, 72
    %v489 = vadd.s32 %v479, 80
    %v490 = vadd.s32 %v479, 88
    %v491 = vadd.s32 %v479, 96
    %v492 = vadd.s32 %v479, 104
    %v493 = vadd.s32 %v479, 112
    %v494 = vadd.s32 %v479, 120
    %v495 = vadd.s32 %v479, 128
    %v496 = vadd.s32 %v479, 136
    %vm497 = vcmp.lt.s32.totalorder %v479, 72
    %vm498 = vcmp.lt.s32.totalorder %v480, 72
    %vm499 = vcmp.lt.s32.totalorder %v481, 72
    %vm500 = vcmp.lt.s32.totalorder %v482, 72
    %vm501 = vcmp.lt.s32.totalorder %v483, 72
    %vm502 = vcmp.lt.s32.totalorder %v484, 72
    %vm503 = vcmp.lt.s32.totalorder %v485, 72
    %vm504 = vcmp.lt.s32.totalorder %v486, 72
    %vm505 = vcmp.lt.s32.totalorder %v487, 72
    %vm506 = vcmp.lt.s32.totalorder %v488, 72
    %vm507 = vcmp.lt.s32.totalorder %v489, 72
    %vm508 = vcmp.lt.s32.totalorder %v490, 72
    %vm509 = vcmp.lt.s32.totalorder %v491, 72
    %vm510 = vcmp.lt.s32.totalorder %v492, 72
    %vm511 = vcmp.lt.s32.totalorder %v493, 72
    %vm512 = vcmp.lt.s32.totalorder %v494, 72
    %vm513 = vcmp.lt.s32.totalorder %v495, 72
    %vm514 = vcmp.lt.s32.totalorder %v496, 72
    %vm515 = vcmask 130048
    %v517 = vsel %vm515, %v477, 0
    %519 = vmatprep.subr.mxu0 0.0
    %520 = vmatpush1.msra.mxu0 %v461
    %521 = vmatprep.subr.mxu0 0.0
    %522 = vmatpush1.msra.mxu0 %v458
    %523 = vmatprep.subr.mxu0 0.0
    %524 = vmatpush1.msra.mxu0 %v453
    %525 = vmatprep.subr.mxu0 0.0
    %526 = vmatpush1.msra.mxu0 %v450
    %527 = vmatprep.subr.mxu0 0.0
    %528 = vmatpush1.msra.mxu0 %v445
    %529 = vmatprep.subr.mxu0 0.0
    %530 = vmatpush1.msra.mxu0 %v442
    %531 = vmatprep.subr.mxu0 0.0
    %532 = vmatpush1.msra.mxu0 %v437
    %533 = vmatprep.subr.mxu0 0.0
    %534 = vmatpush1.msra.mxu0 %v434
    %535 = vmatprep.subr.mxu0 0.0
    %536 = vmatpush1.msra.mxu0 %v429
    %537 = vmatprep.subr.mxu0 0.0
    %538 = vmatpush1.msra.mxu0 %v426
    %539 = vmatprep.subr.mxu0 0.0
    %540 = vmatpush1.msra.mxu0 %v421
    %541 = vmatprep.subr.mxu0 0.0
    %542 = vmatpush1.msra.mxu0 %v418
    %543 = vmatprep.subr.mxu0 0.0
    %544 = vmatpush1.msra.mxu0 %v413
    %545 = vmatprep.subr.mxu0 0.0
    %546 = vmatpush1.msra.mxu0 %v410
    %547 = vmatprep.subr.mxu0 0.0
    %548 = vmatpush1.msra.mxu0 %v405
    %549 = vmatprep.subr.mxu0 0.0
    %550 = vmatpush1.msra.mxu0 %v402
    %551 = vmatprep.subr.mxu0 0.0
    %552 = vmatpush2.msra.mxu0 0.0
    %553 = vmatprep.subr.mxu0 0.0
    %554 = vmatpush2.msra.mxu0 0.0
    %555 = vmatprep.subr.mxu0 0.0
    %556 = vmatpush2.msra.mxu0 0.0
    %557 = vmatprep.subr.mxu0 0.0
    %558 = vmatpush2.msra.mxu0 0.0
    %559 = vmatprep.subr.mxu0 0.0
    %560 = vmatpush2.msra.mxu0 0.0
    %561 = vmatprep.subr.mxu0 0.0
    %562 = vmatpush2.msra.mxu0 0.0
    %563 = vmatprep.subr.mxu0 0.0
    %564 = vmatpush2.msra.mxu0 0.0
    %565 = vmatprep.subr.mxu0 0.0
    %566 = vmatpush2.msra.mxu0 0.0
    %567 = vmatprep.subr.mxu0 0.0
    %568 = vmatpush2.msra.mxu0 0.0
    %569 = vmatprep.subr.mxu0 0.0
    %570 = vmatpush2.msra.mxu0 0.0
    %571 = vmatprep.subr.mxu0 0.0
    %572 = vmatpush2.msra.mxu0 0.0
    %573 = vmatprep.subr.mxu0 0.0
    %574 = vmatpush2.msra.mxu0 0.0
    %575 = vmatprep.subr.mxu0 0.0
    %576 = vmatpush2.msra.mxu0 0.0
    %577 = vmatprep.subr.mxu0 0.0
    %578 = vmatpush2.msra.mxu0 0.0
    %579 = vmatprep.subr.mxu0 0.0
    %580 = vmatpush2.msra.mxu0 %v469
    %581 = vmatprep.subr.mxu0 0.0
    %582 = vmatpush2.msra.mxu0 %v466
    %583 = vmatprep.mubr.f32.mxu0 %v517
    %584 = vmatmul.mubr.f32.gmra.mxu0 %v476
    %v585 = vpop.f32.mrf.mxu0
    %v586 = vadd.f32 0.0, %v585
    %v587 = vpop.f32.mrf.mxu0
    %588 = vdwg.mxu0
    %v589 = vlaneseq
    %v590 = vshrl.u32 %v589, 7
    %v591 = vsub.s32 0, %v590
    %v592 = vrot.slane %v586, %v591
    %v593 = vlaneseq
    %v594 = vshrl.u32 %v593, 7
    %v595 = vsub.s32 1, %v594
    %v596 = vrot.slane %v586, %v595
    %v597 = vsel %vm497, %v592, %v596
    %v598 = vsel %vm498, %v592, %v596
    %v599 = vsel %vm499, %v592, %v596
    %v600 = vsel %vm500, %v592, %v596
    %v601 = vsel %vm501, %v592, %v596
    %v602 = vsel %vm502, %v592, %v596
    %v603 = vsel %vm503, %v592, %v596
    %v604 = vsel %vm504, %v592, %v596
    %v605 = vsel %vm505, %v592, %v596
    %v606 = vsel %vm506, %v592, %v596
    %v607 = vsel %vm507, %v592, %v596
    %v608 = vsel %vm508, %v592, %v596
    %v609 = vsel %vm509, %v592, %v596
    %v610 = vsel %vm510, %v592, %v596
    %v611 = vsel %vm511, %v592, %v596
    %v612 = vsel %vm512, %v592, %v596
    %v613 = vsel %vm513, %v592, %v596
    %v614 = vsel %vm514, %v592, %v596
    %v615 = vsub.f32 %v402, %v597
    %v616 = vsub.f32 %v405, %v598
    %v617 = vsub.f32 %v410, %v599
    %v618 = vsub.f32 %v413, %v600
    %v619 = vsub.f32 %v418, %v601
    %v620 = vsub.f32 %v421, %v602
    %v621 = vsub.f32 %v426, %v603
    %v622 = vsub.f32 %v429, %v604
    %v623 = vsub.f32 %v434, %v605
    %v624 = vsub.f32 %v437, %v606
    %v625 = vsub.f32 %v442, %v607
    %v626 = vsub.f32 %v445, %v608
    %v627 = vsub.f32 %v450, %v609
    %v628 = vsub.f32 %v453, %v610
    %v629 = vsub.f32 %v458, %v611
    %v630 = vsub.f32 %v461, %v612
    %v631 = vsub.f32 %v466, %v613
    %v632 = vsub.f32 %v469, %v614
    %v633 = vmul.f32 %v615, %v615
    %v634 = vmul.f32 %v616, %v616
    %v635 = vmul.f32 %v617, %v617
    %v636 = vmul.f32 %v618, %v618
    %v637 = vmul.f32 %v619, %v619
    %v638 = vmul.f32 %v620, %v620
    %v639 = vmul.f32 %v621, %v621
    %v640 = vmul.f32 %v622, %v622
    %v641 = vmul.f32 %v623, %v623
    %v642 = vmul.f32 %v624, %v624
    %v643 = vmul.f32 %v625, %v625
    %v644 = vmul.f32 %v626, %v626
    %v645 = vmul.f32 %v627, %v627
    %v646 = vmul.f32 %v628, %v628
    %v647 = vmul.f32 %v629, %v629
    %v648 = vmul.f32 %v630, %v630
    %v649 = vmul.f32 %v631, %v631
    %v650 = vmul.f32 %v632, %v632
    %651 = vmatprep.subr.mxu0 0.0
    %652 = vmatpush1.msra.mxu0 %v648
    %653 = vmatprep.subr.mxu0 0.0
    %654 = vmatpush1.msra.mxu0 %v647
    %655 = vmatprep.subr.mxu0 0.0
    %656 = vmatpush1.msra.mxu0 %v646
    %657 = vmatprep.subr.mxu0 0.0
    %658 = vmatpush1.msra.mxu0 %v645
    %659 = vmatprep.subr.mxu0 0.0
    %660 = vmatpush1.msra.mxu0 %v644
    %661 = vmatprep.subr.mxu0 0.0
    %662 = vmatpush1.msra.mxu0 %v643
    %663 = vmatprep.subr.mxu0 0.0
    %664 = vmatpush1.msra.mxu0 %v642
    %665 = vmatprep.subr.mxu0 0.0
    %666 = vmatpush1.msra.mxu0 %v641
    %667 = vmatprep.subr.mxu0 0.0
    %668 = vmatpush1.msra.mxu0 %v640
    %669 = vmatprep.subr.mxu0 0.0
    %670 = vmatpush1.msra.mxu0 %v639
    %671 = vmatprep.subr.mxu0 0.0
    %672 = vmatpush1.msra.mxu0 %v638
    %673 = vmatprep.subr.mxu0 0.0
    %674 = vmatpush1.msra.mxu0 %v637
    %675 = vmatprep.subr.mxu0 0.0
    %676 = vmatpush1.msra.mxu0 %v636
    %677 = vmatprep.subr.mxu0 0.0
    %678 = vmatpush1.msra.mxu0 %v635
    %679 = vmatprep.subr.mxu0 0.0
    %680 = vmatpush1.msra.mxu0 %v634
    %681 = vmatprep.subr.mxu0 0.0
    %682 = vmatpush1.msra.mxu0 %v633
    %683 = vmatprep.subr.mxu0 0.0
    %684 = vmatpush2.msra.mxu0 0.0
    %685 = vmatprep.subr.mxu0 0.0
    %686 = vmatpush2.msra.mxu0 0.0
    %687 = vmatprep.subr.mxu0 0.0
    %688 = vmatpush2.msra.mxu0 0.0
    %689 = vmatprep.subr.mxu0 0.0
    %690 = vmatpush2.msra.mxu0 0.0
    %691 = vmatprep.subr.mxu0 0.0
    %692 = vmatpush2.msra.mxu0 0.0
    %693 = vmatprep.subr.mxu0 0.0
    %694 = vmatpush2.msra.mxu0 0.0
    %695 = vmatprep.subr.mxu0 0.0
    %696 = vmatpush2.msra.mxu0 0.0
    %697 = vmatprep.subr.mxu0 0.0
    %698 = vmatpush2.msra.mxu0 0.0
    %699 = vmatprep.subr.mxu0 0.0
    %700 = vmatpush2.msra.mxu0 0.0
    %701 = vmatprep.subr.mxu0 0.0
    %702 = vmatpush2.msra.mxu0 0.0
    %703 = vmatprep.subr.mxu0 0.0
    %704 = vmatpush2.msra.mxu0 0.0
    %705 = vmatprep.subr.mxu0 0.0
    %706 = vmatpush2.msra.mxu0 0.0
    %707 = vmatprep.subr.mxu0 0.0
    %708 = vmatpush2.msra.mxu0 0.0
    %709 = vmatprep.subr.mxu0 0.0
    %710 = vmatpush2.msra.mxu0 0.0
    %711 = vmatprep.subr.mxu0 0.0
    %712 = vmatpush2.msra.mxu0 %v650
    %713 = vmatprep.subr.mxu0 0.0
    %714 = vmatpush2.msra.mxu0 %v649
    %715 = vmatprep.mubr.f32.mxu0 %v517
    %716 = vmatmul.mubr.f32.gmra.mxu0 %v476
    %v717 = vpop.f32.mrf.mxu0
    %v718 = vadd.f32 0.0, %v717
    %v719 = vpop.f32.mrf.mxu0
    %720 = vdwg.mxu0
    %v721 = vlaneseq
    %v722 = vshrl.u32 %v721, 7
    %v723 = vsub.s32 0, %v722
    %v724 = vrot.slane %v718, %v723
    %v725 = vlaneseq
    %v726 = vshrl.u32 %v725, 7
    %v727 = vsub.s32 1, %v726
    %v728 = vrot.slane %v718, %v727
    %v729 = vsel %vm497, %v724, %v728
    %v730 = vsel %vm498, %v724, %v728
    %v731 = vsel %vm499, %v724, %v728
    %v732 = vsel %vm500, %v724, %v728
    %v733 = vsel %vm501, %v724, %v728
    %v734 = vsel %vm502, %v724, %v728
    %v735 = vsel %vm503, %v724, %v728
    %v736 = vsel %vm504, %v724, %v728
    %v737 = vsel %vm505, %v724, %v728
    %v738 = vsel %vm506, %v724, %v728
    %v739 = vsel %vm507, %v724, %v728
    %v740 = vsel %vm508, %v724, %v728
    %v741 = vsel %vm509, %v724, %v728
    %v742 = vsel %vm510, %v724, %v728
    %v743 = vsel %vm511, %v724, %v728
    %v744 = vsel %vm512, %v724, %v728
    %v745 = vsel %vm513, %v724, %v728
    %v746 = vsel %vm514, %v724, %v728
    %v747 = vadd.f32 %v729, 1e-05
    %v748 = vadd.f32 %v730, 1e-05
    %v749 = vadd.f32 %v731, 1e-05
    %v750 = vadd.f32 %v732, 1e-05
    %v751 = vadd.f32 %v733, 1e-05
    %v752 = vadd.f32 %v734, 1e-05
    %v753 = vadd.f32 %v735, 1e-05
    %v754 = vadd.f32 %v736, 1e-05
    %v755 = vadd.f32 %v737, 1e-05
    %v756 = vadd.f32 %v738, 1e-05
    %v757 = vadd.f32 %v739, 1e-05
    %v758 = vadd.f32 %v740, 1e-05
    %v759 = vadd.f32 %v741, 1e-05
    %v760 = vadd.f32 %v742, 1e-05
    %v761 = vadd.f32 %v743, 1e-05
    %v762 = vadd.f32 %v744, 1e-05
    %v763 = vadd.f32 %v745, 1e-05
    %v764 = vadd.f32 %v746, 1e-05
    %v765 = vrsqrt.pop %v747
    %v766 = vrsqrt.pop %v748
    %v767 = vrsqrt.pop %v749
    %v768 = vrsqrt.pop %v750
    %v769 = vrsqrt.pop %v751
    %v770 = vrsqrt.pop %v752
    %v771 = vrsqrt.pop %v753
    %v772 = vrsqrt.pop %v754
    %v773 = vrsqrt.pop %v755
    %v774 = vrsqrt.pop %v756
    %v775 = vrsqrt.pop %v757
    %v776 = vrsqrt.pop %v758
    %v777 = vrsqrt.pop %v759
    %v778 = vrsqrt.pop %v760
    %v779 = vrsqrt.pop %v761
    %v780 = vrsqrt.pop %v762
    %v781 = vrsqrt.pop %v763
    %v782 = vrsqrt.pop %v764
    %v783 = vmul.f32 %v615, %v765
    %v784 = vmul.f32 %v616, %v766
    %v785 = vmul.f32 %v617, %v767
    %v786 = vmul.f32 %v618, %v768
    %v787 = vmul.f32 %v619, %v769
    %v788 = vmul.f32 %v620, %v770
    %v789 = vmul.f32 %v621, %v771
    %v790 = vmul.f32 %v622, %v772
    %v791 = vmul.f32 %v623, %v773
    %v792 = vmul.f32 %v624, %v774
    %v793 = vmul.f32 %v625, %v775
    %v794 = vmul.f32 %v626, %v776
    %v795 = vmul.f32 %v627, %v777
    %v796 = vmul.f32 %v628, %v778
    %v797 = vmul.f32 %v629, %v779
    %v798 = vmul.f32 %v630, %v780
    %v799 = vmul.f32 %v631, %v781
    %v800 = vmul.f32 %v632, %v782
    %v801 = vlaneseq
    %v802 = vshrl.u32 %v801, 7
    %v803 = vsub.s32 2, %v802
    %v804 = vrot.slane %v40, %v803
    %v805 = vmul.f32 %v783, %v804
    %v806 = vmul.f32 %v784, %v804
    %v807 = vmul.f32 %v785, %v804
    %v808 = vmul.f32 %v786, %v804
    %v809 = vmul.f32 %v787, %v804
    %v810 = vmul.f32 %v788, %v804
    %v811 = vmul.f32 %v789, %v804
    %v812 = vmul.f32 %v790, %v804
    %v813 = vmul.f32 %v791, %v804
    %v814 = vmul.f32 %v792, %v804
    %v815 = vmul.f32 %v793, %v804
    %v816 = vmul.f32 %v794, %v804
    %v817 = vmul.f32 %v795, %v804
    %v818 = vmul.f32 %v796, %v804
    %v819 = vmul.f32 %v797, %v804
    %v820 = vmul.f32 %v798, %v804
    %v821 = vmul.f32 %v799, %v804
    %v822 = vmul.f32 %v800, %v804
    %v823 = vlaneseq
    %v824 = vshrl.u32 %v823, 7
    %v825 = vsub.s32 3, %v824
    %v826 = vrot.slane %v40, %v825
    %v827 = vadd.f32 %v805, %v826
    %v828 = vadd.f32 %v806, %v826
    %v829 = vadd.f32 %v807, %v826
    %v830 = vadd.f32 %v808, %v826
    %v831 = vadd.f32 %v809, %v826
    %v832 = vadd.f32 %v810, %v826
    %v833 = vadd.f32 %v811, %v826
    %v834 = vadd.f32 %v812, %v826
    %v835 = vadd.f32 %v813, %v826
    %v836 = vadd.f32 %v814, %v826
    %v837 = vadd.f32 %v815, %v826
    %v838 = vadd.f32 %v816, %v826
    %v839 = vadd.f32 %v817, %v826
    %v840 = vadd.f32 %v818, %v826
    %v841 = vadd.f32 %v819, %v826
    %v842 = vadd.f32 %v820, %v826
    %v843 = vadd.f32 %v821, %v826
    %v844 = vadd.f32 %v822, %v826
    %v845 = vmax.f32 %v827, 0.0
    %v846 = vmax.f32 %v828, 0.0
    %v847 = vmax.f32 %v829, 0.0
    %v848 = vmax.f32 %v830, 0.0
    %v849 = vmax.f32 %v831, 0.0
    %v850 = vmax.f32 %v832, 0.0
    %v851 = vmax.f32 %v833, 0.0
    %v852 = vmax.f32 %v834, 0.0
    %v853 = vmax.f32 %v835, 0.0
    %v854 = vmax.f32 %v836, 0.0
    %v855 = vmax.f32 %v837, 0.0
    %v856 = vmax.f32 %v838, 0.0
    %v857 = vmax.f32 %v839, 0.0
    %v858 = vmax.f32 %v840, 0.0
    %v859 = vmax.f32 %v841, 0.0
    %v860 = vmax.f32 %v842, 0.0
    %v861 = vmax.f32 %v843, 0.0
    %v862 = vmax.f32 %v844, 0.0
    %v863 = vpack.c.bf16 %v846, %v845
    %v864 = vpack.c.bf16 %v848, %v847
    %v865 = vpack.c.bf16 %v850, %v849
    %v866 = vpack.c.bf16 %v852, %v851
    %v867 = vpack.c.bf16 %v854, %v853
    %v868 = vpack.c.bf16 %v856, %v855
    %v869 = vpack.c.bf16 %v858, %v857
    %v870 = vpack.c.bf16 %v860, %v859
    %v871 = vpack.c.bf16 %v862, %v861
    %v872 = vlaneseq
    %v873 = vshrl.u32 %v872, 7
    %v874 = vsub.s32 4, %v873
    %v875 = vrot.slane %v40, %v874
    %v884 = vunpack.c.l.b16 %v294
    %v885 = vunpack.c.l.b16 %v295
    %v886 = vunpack.c.l.b16 %v296
    %v887 = vunpack.c.l.b16 %v297
    %v888 = vunpack.c.l.b16 %v298
    %v889 = vunpack.c.l.b16 %v299
    %v890 = vunpack.c.l.b16 %v300
    %v891 = vunpack.c.l.b16 %v301
    %v892 = vpack.c.b16 %v885, %v884
    %v893 = vpack.c.b16 %v887, %v886
    %v894 = vpack.c.b16 %v889, %v888
    %v895 = vpack.c.b16 %v891, %v890
    %v901 = vsel %vm339, %v863, 0
    %v904 = vsel %vm339, %v864, 0
    %v907 = vsel %vm339, %v865, 0
    %v910 = vsel %vm339, %v866, 0
    %v913 = vsel %vm339, %v867, 0
    %v916 = vsel %vm339, %v868, 0
    %v919 = vsel %vm339, %v869, 0
    %v922 = vsel %vm339, %v870, 0
    %v925 = vsel %vm339, %v871, 0
    %927 = vmatprep.subr.bf16.mxu0 0
    %928 = vmatpush1.bf16.msra.mxu0 0
    %929 = vmatprep.subr.bf16.mxu0 0
    %930 = vmatpush1.bf16.msra.mxu0 0
    %931 = vmatprep.subr.bf16.mxu0 0
    %932 = vmatpush1.bf16.msra.mxu0 0
    %933 = vmatprep.subr.bf16.mxu0 0
    %934 = vmatpush1.bf16.msra.mxu0 0
    %935 = vmatprep.subr.bf16.mxu0 0
    %936 = vmatpush1.bf16.msra.mxu0 %v895
    %937 = vmatprep.subr.bf16.mxu0 0
    %938 = vmatpush1.bf16.msra.mxu0 %v894
    %939 = vmatprep.subr.bf16.mxu0 0
    %940 = vmatpush1.bf16.msra.mxu0 %v893
    %941 = vmatprep.subr.bf16.mxu0 0
    %942 = vmatpush1.bf16.msra.mxu0 %v892
    %943 = vmatprep.subr.bf16.mxu0 0
    %944 = vmatpush2.bf16.msra.mxu0 0
    %945 = vmatprep.subr.bf16.mxu0 0
    %946 = vmatpush2.bf16.msra.mxu0 0
    %947 = vmatprep.subr.bf16.mxu0 0
    %948 = vmatpush2.bf16.msra.mxu0 0
    %949 = vmatprep.subr.bf16.mxu0 0
    %950 = vmatpush2.bf16.msra.mxu0 0
    %951 = vmatprep.subr.bf16.mxu0 0
    %952 = vmatpush2.bf16.msra.mxu0 0
    %953 = vmatprep.subr.bf16.mxu0 0
    %954 = vmatpush2.bf16.msra.mxu0 0
    %955 = vmatprep.subr.bf16.mxu0 0
    %956 = vmatpush2.bf16.msra.mxu0 0
    %957 = vmatprep.subr.bf16.mxu0 0
    %958 = vmatpush2.bf16.msra.mxu0 0
    %959 = vmatprep.mubr.bf16.mxu0 0
    %960 = vmatmul.mubr.bf16.gmra.mxu0 %v901
    %v961 = vpop.f32.mrf.mxu0
    %v962 = vadd.f32 %v875, %v961
    %v963 = vpop.f32.mrf.mxu0
    %v964 = vpop.f32.mrf.mxu0
    %v965 = vadd.f32 %v875, %v964
    %v966 = vpop.f32.mrf.mxu0
    %967 = vmatprep.mubr.bf16.mxu0 0
    %968 = vmatmul.mubr.bf16.gmra.mxu0 %v904
    %v969 = vpop.f32.mrf.mxu0
    %v970 = vadd.f32 %v875, %v969
    %v971 = vpop.f32.mrf.mxu0
    %v972 = vpop.f32.mrf.mxu0
    %v973 = vadd.f32 %v875, %v972
    %v974 = vpop.f32.mrf.mxu0
    %975 = vmatprep.mubr.bf16.mxu0 0
    %976 = vmatmul.mubr.bf16.gmra.mxu0 %v907
    %v977 = vpop.f32.mrf.mxu0
    %v978 = vadd.f32 %v875, %v977
    %v979 = vpop.f32.mrf.mxu0
    %v980 = vpop.f32.mrf.mxu0
    %v981 = vadd.f32 %v875, %v980
    %v982 = vpop.f32.mrf.mxu0
    %983 = vmatprep.mubr.bf16.mxu0 0
    %984 = vmatmul.mubr.bf16.gmra.mxu0 %v910
    %v985 = vpop.f32.mrf.mxu0
    %v986 = vadd.f32 %v875, %v985
    %v987 = vpop.f32.mrf.mxu0
    %v988 = vpop.f32.mrf.mxu0
    %v989 = vadd.f32 %v875, %v988
    %v990 = vpop.f32.mrf.mxu0
    %991 = vmatprep.mubr.bf16.mxu0 0
    %992 = vmatmul.mubr.bf16.gmra.mxu0 %v913
    %v993 = vpop.f32.mrf.mxu0
    %v994 = vadd.f32 %v875, %v993
    %v995 = vpop.f32.mrf.mxu0
    %v996 = vpop.f32.mrf.mxu0
    %v997 = vadd.f32 %v875, %v996
    %v998 = vpop.f32.mrf.mxu0
    %999 = vmatprep.mubr.bf16.mxu0 0
    %1000 = vmatmul.mubr.bf16.gmra.mxu0 %v916
    %v1001 = vpop.f32.mrf.mxu0
    %v1002 = vadd.f32 %v875, %v1001
    %v1003 = vpop.f32.mrf.mxu0
    %v1004 = vpop.f32.mrf.mxu0
    %v1005 = vadd.f32 %v875, %v1004
    %v1006 = vpop.f32.mrf.mxu0
    %1007 = vmatprep.mubr.bf16.mxu0 0
    %1008 = vmatmul.mubr.bf16.gmra.mxu0 %v919
    %v1009 = vpop.f32.mrf.mxu0
    %v1010 = vadd.f32 %v875, %v1009
    %v1011 = vpop.f32.mrf.mxu0
    %v1012 = vpop.f32.mrf.mxu0
    %v1013 = vadd.f32 %v875, %v1012
    %v1014 = vpop.f32.mrf.mxu0
    %1015 = vmatprep.mubr.bf16.mxu0 0
    %1016 = vmatmul.mubr.bf16.gmra.mxu0 %v922
    %v1017 = vpop.f32.mrf.mxu0
    %v1018 = vadd.f32 %v875, %v1017
    %v1019 = vpop.f32.mrf.mxu0
    %v1020 = vpop.f32.mrf.mxu0
    %v1021 = vadd.f32 %v875, %v1020
    %v1022 = vpop.f32.mrf.mxu0
    %1023 = vmatprep.mubr.bf16.mxu0 0
    %1024 = vmatmul.mubr.bf16.gmra.mxu0 %v925
    %v1025 = vpop.f32.mrf.mxu0
    %v1026 = vadd.f32 %v875, %v1025
    %v1027 = vpop.f32.mrf.mxu0
    %v1028 = vpop.f32.mrf.mxu0
    %v1029 = vadd.f32 %v875, %v1028
    %v1030 = vpop.f32.mrf.mxu0
    %1031 = vdwg.mxu0
    %v1032 = vlaneseq
    %v1033 = vand.u32 %v1032, 127
    %vm1034 = vcmp.ge.s32.totalorder %v1033, 32
    %v1035 = vmul.f32 %v251, %v251
    %v1036 = vmul.f32 %v256, %v256
    %v1037 = vmul.f32 %v259, %v259
    %v1038 = vmul.f32 %v264, %v264
    %v1039 = vmul.f32 %v267, %v267
    %v1040 = vmul.f32 %v272, %v272
    %v1041 = vmul.f32 %v275, %v275
    %v1042 = vmul.f32 %v280, %v280
    %v1043 = vmul.f32 %v283, %v283
    %v1044 = vmul.f32 %v216, %v216
    %v1045 = vmul.f32 %v219, %v219
    %v1046 = vmul.f32 %v224, %v224
    %v1047 = vmul.f32 %v227, %v227
    %v1048 = vmul.f32 %v232, %v232
    %v1049 = vmul.f32 %v235, %v235
    %v1050 = vmul.f32 %v240, %v240
    %v1051 = vmul.f32 %v243, %v243
    %v1052 = vmul.f32 %v248, %v248
    %v1053 = vsel %vm1034, %v1035, 0.0
    %v1054 = vsel %vm1034, %v1036, 0.0
    %v1055 = vsel %vm1034, %v1037, 0.0
    %v1056 = vsel %vm1034, %v1038, 0.0
    %v1057 = vsel %vm1034, %v1039, 0.0
    %v1058 = vsel %vm1034, %v1040, 0.0
    %v1059 = vsel %vm1034, %v1041, 0.0
    %v1060 = vsel %vm1034, %v1042, 0.0
    %v1061 = vsel %vm1034, %v1043, 0.0
    %v1062 = vsel %vm1034, %v1044, 0.0
    %v1063 = vsel %vm1034, %v1045, 0.0
    %v1064 = vsel %vm1034, %v1046, 0.0
    %v1065 = vsel %vm1034, %v1047, 0.0
    %v1066 = vsel %vm1034, %v1048, 0.0
    %v1067 = vsel %vm1034, %v1049, 0.0
    %v1068 = vsel %vm1034, %v1050, 0.0
    %v1069 = vsel %vm1034, %v1051, 0.0
    %v1070 = vsel %vm1034, %v1052, 0.0
    %v1071 = vmul.f32 %v962, %v251
    %v1072 = vmul.f32 %v965, %v256
    %v1073 = vmul.f32 %v970, %v259
    %v1074 = vmul.f32 %v973, %v264
    %v1075 = vmul.f32 %v978, %v267
    %v1076 = vmul.f32 %v981, %v272
    %v1077 = vmul.f32 %v986, %v275
    %v1078 = vmul.f32 %v989, %v280
    %v1079 = vmul.f32 %v994, %v283
    %v1080 = vmul.f32 %v997, %v216
    %v1081 = vmul.f32 %v1002, %v219
    %v1082 = vmul.f32 %v1005, %v224
    %v1083 = vmul.f32 %v1010, %v227
    %v1084 = vmul.f32 %v1013, %v232
    %v1085 = vmul.f32 %v1018, %v235
    %v1086 = vmul.f32 %v1021, %v240
    %v1087 = vmul.f32 %v1026, %v243
    %v1088 = vmul.f32 %v1029, %v248
    %v1089 = vsel %vm339, %v1071, 0.0
    %1090 = vadd.xlane.f32.xlu0 %v1089
    %v1091 = vpop.xlane.xlu0 %1090
    %v1092 = vsel %vm339, %v1072, 0.0
    %1093 = vadd.xlane.f32.xlu0 %v1092
    %v1094 = vpop.xlane.xlu0 %1093
    %v1095 = vsel %vm339, %v1073, 0.0
    %1096 = vadd.xlane.f32.xlu0 %v1095
    %v1097 = vpop.xlane.xlu0 %1096
    %v1098 = vsel %vm339, %v1074, 0.0
    %1099 = vadd.xlane.f32.xlu0 %v1098
    %v1100 = vpop.xlane.xlu0 %1099
    %v1101 = vsel %vm339, %v1075, 0.0
    %1102 = vadd.xlane.f32.xlu0 %v1101
    %v1103 = vpop.xlane.xlu0 %1102
    %v1104 = vsel %vm339, %v1076, 0.0
    %1105 = vadd.xlane.f32.xlu0 %v1104
    %v1106 = vpop.xlane.xlu0 %1105
    %v1107 = vsel %vm339, %v1077, 0.0
    %1108 = vadd.xlane.f32.xlu0 %v1107
    %v1109 = vpop.xlane.xlu0 %1108
    %v1110 = vsel %vm339, %v1078, 0.0
    %1111 = vadd.xlane.f32.xlu0 %v1110
    %v1112 = vpop.xlane.xlu0 %1111
    %v1113 = vsel %vm339, %v1079, 0.0
    %1114 = vadd.xlane.f32.xlu0 %v1113
    %v1115 = vpop.xlane.xlu0 %1114
    %v1116 = vsel %vm339, %v1080, 0.0
    %1117 = vadd.xlane.f32.xlu0 %v1116
    %v1118 = vpop.xlane.xlu0 %1117
    %v1119 = vsel %vm339, %v1081, 0.0
    %1120 = vadd.xlane.f32.xlu0 %v1119
    %v1121 = vpop.xlane.xlu0 %1120
    %v1122 = vsel %vm339, %v1082, 0.0
    %1123 = vadd.xlane.f32.xlu0 %v1122
    %v1124 = vpop.xlane.xlu0 %1123
    %v1125 = vsel %vm339, %v1083, 0.0
    %1126 = vadd.xlane.f32.xlu0 %v1125
    %v1127 = vpop.xlane.xlu0 %1126
    %v1128 = vsel %vm339, %v1084, 0.0
    %1129 = vadd.xlane.f32.xlu0 %v1128
    %v1130 = vpop.xlane.xlu0 %1129
    %v1131 = vsel %vm339, %v1085, 0.0
    %1132 = vadd.xlane.f32.xlu0 %v1131
    %v1133 = vpop.xlane.xlu0 %1132
    %v1134 = vsel %vm339, %v1086, 0.0
    %1135 = vadd.xlane.f32.xlu0 %v1134
    %v1136 = vpop.xlane.xlu0 %1135
    %v1137 = vsel %vm339, %v1087, 0.0
    %1138 = vadd.xlane.f32.xlu0 %v1137
    %v1139 = vpop.xlane.xlu0 %1138
    %v1140 = vsel %vm339, %v1088, 0.0
    %1141 = vadd.xlane.f32.xlu0 %v1140
    %v1142 = vpop.xlane.xlu0 %1141
    %v1143 = vmul.f32 %v962, %v962
    %v1144 = vmul.f32 %v965, %v965
    %v1145 = vmul.f32 %v970, %v970
    %v1146 = vmul.f32 %v973, %v973
    %v1147 = vmul.f32 %v978, %v978
    %v1148 = vmul.f32 %v981, %v981
    %v1149 = vmul.f32 %v986, %v986
    %v1150 = vmul.f32 %v989, %v989
    %v1151 = vmul.f32 %v994, %v994
    %v1152 = vmul.f32 %v997, %v997
    %v1153 = vmul.f32 %v1002, %v1002
    %v1154 = vmul.f32 %v1005, %v1005
    %v1155 = vmul.f32 %v1010, %v1010
    %v1156 = vmul.f32 %v1013, %v1013
    %v1157 = vmul.f32 %v1018, %v1018
    %v1158 = vmul.f32 %v1021, %v1021
    %v1159 = vmul.f32 %v1026, %v1026
    %v1160 = vmul.f32 %v1029, %v1029
    %v1161 = vsel %vm339, %v1143, 0.0
    %1162 = vadd.xlane.f32.xlu0 %v1161
    %v1163 = vpop.xlane.xlu0 %1162
    %v1164 = vsel %vm339, %v1144, 0.0
    %1165 = vadd.xlane.f32.xlu0 %v1164
    %v1166 = vpop.xlane.xlu0 %1165
    %v1167 = vsel %vm339, %v1145, 0.0
    %1168 = vadd.xlane.f32.xlu0 %v1167
    %v1169 = vpop.xlane.xlu0 %1168
    %v1170 = vsel %vm339, %v1146, 0.0
    %1171 = vadd.xlane.f32.xlu0 %v1170
    %v1172 = vpop.xlane.xlu0 %1171
    %v1173 = vsel %vm339, %v1147, 0.0
    %1174 = vadd.xlane.f32.xlu0 %v1173
    %v1175 = vpop.xlane.xlu0 %1174
    %v1176 = vsel %vm339, %v1148, 0.0
    %1177 = vadd.xlane.f32.xlu0 %v1176
    %v1178 = vpop.xlane.xlu0 %1177
    %v1179 = vsel %vm339, %v1149, 0.0
    %1180 = vadd.xlane.f32.xlu0 %v1179
    %v1181 = vpop.xlane.xlu0 %1180
    %v1182 = vsel %vm339, %v1150, 0.0
    %1183 = vadd.xlane.f32.xlu0 %v1182
    %v1184 = vpop.xlane.xlu0 %1183
    %v1185 = vsel %vm339, %v1151, 0.0
    %1186 = vadd.xlane.f32.xlu0 %v1185
    %v1187 = vpop.xlane.xlu0 %1186
    %v1188 = vsel %vm339, %v1152, 0.0
    %1189 = vadd.xlane.f32.xlu0 %v1188
    %v1190 = vpop.xlane.xlu0 %1189
    %v1191 = vsel %vm339, %v1153, 0.0
    %1192 = vadd.xlane.f32.xlu0 %v1191
    %v1193 = vpop.xlane.xlu0 %1192
    %v1194 = vsel %vm339, %v1154, 0.0
    %1195 = vadd.xlane.f32.xlu0 %v1194
    %v1196 = vpop.xlane.xlu0 %1195
    %v1197 = vsel %vm339, %v1155, 0.0
    %1198 = vadd.xlane.f32.xlu0 %v1197
    %v1199 = vpop.xlane.xlu0 %1198
    %v1200 = vsel %vm339, %v1156, 0.0
    %1201 = vadd.xlane.f32.xlu0 %v1200
    %v1202 = vpop.xlane.xlu0 %1201
    %v1203 = vsel %vm339, %v1157, 0.0
    %1204 = vadd.xlane.f32.xlu0 %v1203
    %v1205 = vpop.xlane.xlu0 %1204
    %v1206 = vsel %vm339, %v1158, 0.0
    %1207 = vadd.xlane.f32.xlu0 %v1206
    %v1208 = vpop.xlane.xlu0 %1207
    %v1209 = vsel %vm339, %v1159, 0.0
    %1210 = vadd.xlane.f32.xlu0 %v1209
    %v1211 = vpop.xlane.xlu0 %1210
    %v1212 = vsel %vm339, %v1160, 0.0
    %1213 = vadd.xlane.f32.xlu0 %v1212
    %v1214 = vpop.xlane.xlu0 %1213
    %v1215 = vsel %vm339, %v1053, 0.0
    %1216 = vadd.xlane.f32.xlu0 %v1215
    %v1217 = vpop.xlane.xlu0 %1216
    %v1218 = vsel %vm339, %v1054, 0.0
    %1219 = vadd.xlane.f32.xlu0 %v1218
    %v1220 = vpop.xlane.xlu0 %1219
    %v1221 = vsel %vm339, %v1055, 0.0
    %1222 = vadd.xlane.f32.xlu0 %v1221
    %v1223 = vpop.xlane.xlu0 %1222
    %v1224 = vsel %vm339, %v1056, 0.0
    %1225 = vadd.xlane.f32.xlu0 %v1224
    %v1226 = vpop.xlane.xlu0 %1225
    %v1227 = vsel %vm339, %v1057, 0.0
    %1228 = vadd.xlane.f32.xlu0 %v1227
    %v1229 = vpop.xlane.xlu0 %1228
    %v1230 = vsel %vm339, %v1058, 0.0
    %1231 = vadd.xlane.f32.xlu0 %v1230
    %v1232 = vpop.xlane.xlu0 %1231
    %v1233 = vsel %vm339, %v1059, 0.0
    %1234 = vadd.xlane.f32.xlu0 %v1233
    %v1235 = vpop.xlane.xlu0 %1234
    %v1236 = vsel %vm339, %v1060, 0.0
    %1237 = vadd.xlane.f32.xlu0 %v1236
    %v1238 = vpop.xlane.xlu0 %1237
    %v1239 = vsel %vm339, %v1061, 0.0
    %1240 = vadd.xlane.f32.xlu0 %v1239
    %v1241 = vpop.xlane.xlu0 %1240
    %v1242 = vsel %vm339, %v1062, 0.0
    %1243 = vadd.xlane.f32.xlu0 %v1242
    %v1244 = vpop.xlane.xlu0 %1243
    %v1245 = vsel %vm339, %v1063, 0.0
    %1246 = vadd.xlane.f32.xlu0 %v1245
    %v1247 = vpop.xlane.xlu0 %1246
    %v1248 = vsel %vm339, %v1064, 0.0
    %1249 = vadd.xlane.f32.xlu0 %v1248
    %v1250 = vpop.xlane.xlu0 %1249
    %v1251 = vsel %vm339, %v1065, 0.0
    %1252 = vadd.xlane.f32.xlu0 %v1251
    %v1253 = vpop.xlane.xlu0 %1252
    %v1254 = vsel %vm339, %v1066, 0.0
    %1255 = vadd.xlane.f32.xlu0 %v1254
    %v1256 = vpop.xlane.xlu0 %1255
    %v1257 = vsel %vm339, %v1067, 0.0
    %1258 = vadd.xlane.f32.xlu0 %v1257
    %v1259 = vpop.xlane.xlu0 %1258
    %v1260 = vsel %vm339, %v1068, 0.0
    %1261 = vadd.xlane.f32.xlu0 %v1260
    %v1262 = vpop.xlane.xlu0 %1261
    %v1263 = vsel %vm339, %v1069, 0.0
    %1264 = vadd.xlane.f32.xlu0 %v1263
    %v1265 = vpop.xlane.xlu0 %1264
    %v1266 = vsel %vm339, %v1070, 0.0
    %1267 = vadd.xlane.f32.xlu0 %v1266
    %v1268 = vpop.xlane.xlu0 %1267
    %vm1269 = vcmp.eq.s32.totalorder %v1033, 0
    %vm1270 = vcmp.eq.s32.totalorder %v1033, 1
    %v1271 = vsel %vm1270, %v1163, %v1217
    %v1272 = vsel %vm1270, %v1166, %v1220
    %v1273 = vsel %vm1270, %v1169, %v1223
    %v1274 = vsel %vm1270, %v1172, %v1226
    %v1275 = vsel %vm1270, %v1175, %v1229
    %v1276 = vsel %vm1270, %v1178, %v1232
    %v1277 = vsel %vm1270, %v1181, %v1235
    %v1278 = vsel %vm1270, %v1184, %v1238
    %v1279 = vsel %vm1270, %v1187, %v1241
    %v1280 = vsel %vm1270, %v1190, %v1244
    %v1281 = vsel %vm1270, %v1193, %v1247
    %v1282 = vsel %vm1270, %v1196, %v1250
    %v1283 = vsel %vm1270, %v1199, %v1253
    %v1284 = vsel %vm1270, %v1202, %v1256
    %v1285 = vsel %vm1270, %v1205, %v1259
    %v1286 = vsel %vm1270, %v1208, %v1262
    %v1287 = vsel %vm1270, %v1211, %v1265
    %v1288 = vsel %vm1270, %v1214, %v1268
    %v1289 = vsel %vm1269, %v1091, %v1271
    %v1290 = vsel %vm1269, %v1094, %v1272
    %v1291 = vsel %vm1269, %v1097, %v1273
    %v1292 = vsel %vm1269, %v1100, %v1274
    %v1293 = vsel %vm1269, %v1103, %v1275
    %v1294 = vsel %vm1269, %v1106, %v1276
    %v1295 = vsel %vm1269, %v1109, %v1277
    %v1296 = vsel %vm1269, %v1112, %v1278
    %v1297 = vsel %vm1269, %v1115, %v1279
    %v1298 = vsel %vm1269, %v1118, %v1280
    %v1299 = vsel %vm1269, %v1121, %v1281
    %v1300 = vsel %vm1269, %v1124, %v1282
    %v1301 = vsel %vm1269, %v1127, %v1283
    %v1302 = vsel %vm1269, %v1130, %v1284
    %v1303 = vsel %vm1269, %v1133, %v1285
    %v1304 = vsel %vm1269, %v1136, %v1286
    %v1305 = vsel %vm1269, %v1139, %v1287
    %v1306 = vsel %vm1269, %v1142, %v1288
    %v1308 = vsel %vm515, %v473, 0
    %v1311 = vsel %vm515, %v475, 0
    %1313 = vmatprep.subr.mxu0 0.0
    %1314 = vmatpush1.msra.mxu0 %v1304
    %1315 = vmatprep.subr.mxu0 0.0
    %1316 = vmatpush1.msra.mxu0 %v1303
    %1317 = vmatprep.subr.mxu0 0.0
    %1318 = vmatpush1.msra.mxu0 %v1302
    %1319 = vmatprep.subr.mxu0 0.0
    %1320 = vmatpush1.msra.mxu0 %v1301
    %1321 = vmatprep.subr.mxu0 0.0
    %1322 = vmatpush1.msra.mxu0 %v1300
    %1323 = vmatprep.subr.mxu0 0.0
    %1324 = vmatpush1.msra.mxu0 %v1299
    %1325 = vmatprep.subr.mxu0 0.0
    %1326 = vmatpush1.msra.mxu0 %v1298
    %1327 = vmatprep.subr.mxu0 0.0
    %1328 = vmatpush1.msra.mxu0 %v1297
    %1329 = vmatprep.subr.mxu0 0.0
    %1330 = vmatpush1.msra.mxu0 %v1296
    %1331 = vmatprep.subr.mxu0 0.0
    %1332 = vmatpush1.msra.mxu0 %v1295
    %1333 = vmatprep.subr.mxu0 0.0
    %1334 = vmatpush1.msra.mxu0 %v1294
    %1335 = vmatprep.subr.mxu0 0.0
    %1336 = vmatpush1.msra.mxu0 %v1293
    %1337 = vmatprep.subr.mxu0 0.0
    %1338 = vmatpush1.msra.mxu0 %v1292
    %1339 = vmatprep.subr.mxu0 0.0
    %1340 = vmatpush1.msra.mxu0 %v1291
    %1341 = vmatprep.subr.mxu0 0.0
    %1342 = vmatpush1.msra.mxu0 %v1290
    %1343 = vmatprep.subr.mxu0 0.0
    %1344 = vmatpush1.msra.mxu0 %v1289
    %1345 = vmatprep.subr.mxu0 0.0
    %1346 = vmatpush2.msra.mxu0 0.0
    %1347 = vmatprep.subr.mxu0 0.0
    %1348 = vmatpush2.msra.mxu0 0.0
    %1349 = vmatprep.subr.mxu0 0.0
    %1350 = vmatpush2.msra.mxu0 0.0
    %1351 = vmatprep.subr.mxu0 0.0
    %1352 = vmatpush2.msra.mxu0 0.0
    %1353 = vmatprep.subr.mxu0 0.0
    %1354 = vmatpush2.msra.mxu0 0.0
    %1355 = vmatprep.subr.mxu0 0.0
    %1356 = vmatpush2.msra.mxu0 0.0
    %1357 = vmatprep.subr.mxu0 0.0
    %1358 = vmatpush2.msra.mxu0 0.0
    %1359 = vmatprep.subr.mxu0 0.0
    %1360 = vmatpush2.msra.mxu0 0.0
    %1361 = vmatprep.subr.mxu0 0.0
    %1362 = vmatpush2.msra.mxu0 0.0
    %1363 = vmatprep.subr.mxu0 0.0
    %1364 = vmatpush2.msra.mxu0 0.0
    %1365 = vmatprep.subr.mxu0 0.0
    %1366 = vmatpush2.msra.mxu0 0.0
    %1367 = vmatprep.subr.mxu0 0.0
    %1368 = vmatpush2.msra.mxu0 0.0
    %1369 = vmatprep.subr.mxu0 0.0
    %1370 = vmatpush2.msra.mxu0 0.0
    %1371 = vmatprep.subr.mxu0 0.0
    %1372 = vmatpush2.msra.mxu0 0.0
    %1373 = vmatprep.subr.mxu0 0.0
    %1374 = vmatpush2.msra.mxu0 %v1306
    %1375 = vmatprep.subr.mxu0 0.0
    %1376 = vmatpush2.msra.mxu0 %v1305
    %1377 = vmatprep.mubr.f32.mxu0 %v1308
    %1378 = vmatmul.mubr.f32.gmra.mxu0 %v472
    %v1379 = vpop.f32.mrf.mxu0
    %v1380 = vadd.f32 0.0, %v1379
    %v1381 = vpop.f32.mrf.mxu0
    %1382 = vmatprep.mubr.f32.mxu0 %v1311
    %1383 = vmatmul.mubr.f32.gmra.mxu0 %v474
    %v1384 = vpop.f32.mrf.mxu0
    %v1385 = vadd.f32 0.0, %v1384
    %v1386 = vpop.f32.mrf.mxu0
    %1387 = vdwg.mxu0
    %v1388 = vrsqrt.pop %v1380
    %v1389 = vmul.f32 %v1380, %v1388
    %vm1390 = vcmp.eq.f32.partialorder %v1380, inf
    %v1391 = vsel %vm1390, %v1380, %v1389
    %vm1392 = vcmp.eq.f32.partialorder %v1380, 0.0
    %v1393 = vand.u32 %v1380, 2147483648
    %v1394 = vsel %vm1392, %v1393, %v1391
    %v1395 = vrsqrt.pop %v1385
    %v1396 = vmul.f32 %v1385, %v1395
    %vm1397 = vcmp.eq.f32.partialorder %v1385, inf
    %v1398 = vsel %vm1397, %v1385, %v1396
    %vm1399 = vcmp.eq.f32.partialorder %v1385, 0.0
    %v1400 = vand.u32 %v1385, 2147483648
    %v1401 = vsel %vm1399, %v1400, %v1398
    %v1402 = vmax.f32 %v1394, 1e-12
    %v1403 = vmax.f32 %v1401, 1e-12
    %1406 = vrot.lane.b32.xlu0 %v1402, 127
    %v1407 = vpop.permute.xlu0 %1406
    %1408 = vrot.lane.b32.xlu0 %v1403, 127
    %v1409 = vpop.permute.xlu0 %1408
    %v1412 = vmul.f32 %v1402, %v1407
    %v1413 = vmul.f32 %v1403, %v1409
    %1416 = vrot.lane.b32.xlu0 %v1412, 127
    %v1417 = vpop.permute.xlu0 %1416
    %1418 = vrot.lane.b32.xlu0 %v1413, 127
    %v1419 = vpop.permute.xlu0 %1418
    %v1422 = vrcp.pop %v1417
    %v1423 = vmul.f32 %v1380, %v1422
    %v1424 = vrcp.pop %v1419
    %v1425 = vmul.f32 %v1385, %v1424
    %v1426 = vmul.f32 %v1423, 2.0
    %v1427 = vmul.f32 %v1425, 2.0
    %v1428 = vsub.f32 2.0, %v1426
    %v1429 = vsub.f32 2.0, %v1427
    %vm1430 = vcmask 7168
    %v1431 = vsel %vm1430, %v1428, 0.0
    %v1432 = vsel %vm1430, %v1429, 0.0
    %v1433 = vadd.f32 %v1431, %v1432
    %v1434 = vrot.slane %v1433, 4
    %v1435 = vadd.f32 %v1433, %v1434
    %v1436 = vrot.slane %v1435, 2
    %v1437 = vadd.f32 %v1435, %v1436
    %v1438 = vrot.slane %v1437, 1
    %v1439 = vadd.f32 %v1437, %v1438
    %v1440 = vmul.f32 %v1439, 0.125
    %v1441 = vlaneseq
    %v1442 = vshrl.u32 %v1441, 7
    %v1443 = vsub.s32 5, %v1442
    %v1444 = vrot.slane %v40, %v1443
    %v1445 = vmul.f32 %v216, %v1444
    %v1446 = vmul.f32 %v219, %v1444
    %v1447 = vmul.f32 %v224, %v1444
    %v1448 = vmul.f32 %v227, %v1444
    %v1449 = vmul.f32 %v232, %v1444
    %v1450 = vmul.f32 %v235, %v1444
    %v1451 = vmul.f32 %v240, %v1444
    %v1452 = vmul.f32 %v243, %v1444
    %v1453 = vmul.f32 %v248, %v1444
    %v1454 = vmul.f32 %v251, %v1444
    %v1455 = vmul.f32 %v256, %v1444
    %v1456 = vmul.f32 %v259, %v1444
    %v1457 = vmul.f32 %v264, %v1444
    %v1458 = vmul.f32 %v267, %v1444
    %v1459 = vmul.f32 %v272, %v1444
    %v1460 = vmul.f32 %v275, %v1444
    %v1461 = vmul.f32 %v280, %v1444
    %v1462 = vmul.f32 %v283, %v1444
    %v1463 = vsel %vm339, %v1445, 0.0
    %1464 = vadd.xlane.f32.xlu0 %v1463
    %v1465 = vpop.xlane.xlu0 %1464
    %v1466 = vsel %vm339, %v1446, 0.0
    %1467 = vadd.xlane.f32.xlu0 %v1466
    %v1468 = vpop.xlane.xlu0 %1467
    %v1469 = vsel %vm339, %v1447, 0.0
    %1470 = vadd.xlane.f32.xlu0 %v1469
    %v1471 = vpop.xlane.xlu0 %1470
    %v1472 = vsel %vm339, %v1448, 0.0
    %1473 = vadd.xlane.f32.xlu0 %v1472
    %v1474 = vpop.xlane.xlu0 %1473
    %v1475 = vsel %vm339, %v1449, 0.0
    %1476 = vadd.xlane.f32.xlu0 %v1475
    %v1477 = vpop.xlane.xlu0 %1476
    %v1478 = vsel %vm339, %v1450, 0.0
    %1479 = vadd.xlane.f32.xlu0 %v1478
    %v1480 = vpop.xlane.xlu0 %1479
    %v1481 = vsel %vm339, %v1451, 0.0
    %1482 = vadd.xlane.f32.xlu0 %v1481
    %v1483 = vpop.xlane.xlu0 %1482
    %v1484 = vsel %vm339, %v1452, 0.0
    %1485 = vadd.xlane.f32.xlu0 %v1484
    %v1486 = vpop.xlane.xlu0 %1485
    %v1487 = vsel %vm339, %v1453, 0.0
    %1488 = vadd.xlane.f32.xlu0 %v1487
    %v1489 = vpop.xlane.xlu0 %1488
    %v1490 = vsel %vm339, %v1454, 0.0
    %1491 = vadd.xlane.f32.xlu0 %v1490
    %v1492 = vpop.xlane.xlu0 %1491
    %v1493 = vsel %vm339, %v1455, 0.0
    %1494 = vadd.xlane.f32.xlu0 %v1493
    %v1495 = vpop.xlane.xlu0 %1494
    %v1496 = vsel %vm339, %v1456, 0.0
    %1497 = vadd.xlane.f32.xlu0 %v1496
    %v1498 = vpop.xlane.xlu0 %1497
    %v1499 = vsel %vm339, %v1457, 0.0
    %1500 = vadd.xlane.f32.xlu0 %v1499
    %v1501 = vpop.xlane.xlu0 %1500
    %v1502 = vsel %vm339, %v1458, 0.0
    %1503 = vadd.xlane.f32.xlu0 %v1502
    %v1504 = vpop.xlane.xlu0 %1503
    %v1505 = vsel %vm339, %v1459, 0.0
    %1506 = vadd.xlane.f32.xlu0 %v1505
    %v1507 = vpop.xlane.xlu0 %1506
    %v1508 = vsel %vm339, %v1460, 0.0
    %1509 = vadd.xlane.f32.xlu0 %v1508
    %v1510 = vpop.xlane.xlu0 %1509
    %v1511 = vsel %vm339, %v1461, 0.0
    %1512 = vadd.xlane.f32.xlu0 %v1511
    %v1513 = vpop.xlane.xlu0 %1512
    %v1514 = vsel %vm339, %v1462, 0.0
    %1515 = vadd.xlane.f32.xlu0 %v1514
    %v1516 = vpop.xlane.xlu0 %1515
    %s1517 = sld [smem:[#allocation2]]
    %v1518 = vstv %s1517
    %v1519 = vadd.f32 %v1465, %v1518
    %v1520 = vadd.f32 %v1468, %v1518
    %v1521 = vadd.f32 %v1471, %v1518
    %v1522 = vadd.f32 %v1474, %v1518
    %v1523 = vadd.f32 %v1477, %v1518
    %v1524 = vadd.f32 %v1480, %v1518
    %v1525 = vadd.f32 %v1483, %v1518
    %v1526 = vadd.f32 %v1486, %v1518
    %v1527 = vadd.f32 %v1489, %v1518
    %v1528 = vadd.f32 %v1492, %v1518
    %v1529 = vadd.f32 %v1495, %v1518
    %v1530 = vadd.f32 %v1498, %v1518
    %v1531 = vadd.f32 %v1501, %v1518
    %v1532 = vadd.f32 %v1504, %v1518
    %v1533 = vadd.f32 %v1507, %v1518
    %v1534 = vadd.f32 %v1510, %v1518
    %v1535 = vadd.f32 %v1513, %v1518
    %v1536 = vadd.f32 %v1516, %v1518
    %v1537 = vld [vmem:[%s6] sm:$0xff]
    %v1538 = vld [vmem:[%s6 + $0x8] sm:$0xff]
    %v1539 = vld [vmem:[%s6 + $0x10] sm:$0xff]
    %v1540 = vld [vmem:[%s6 + $0x18] sm:$0xff]
    %v1541 = vld [vmem:[%s6 + $0x20] sm:$0xff]
    %v1542 = vld [vmem:[%s6 + $0x28] sm:$0xff]
    %v1543 = vld [vmem:[%s6 + $0x30] sm:$0xff]
    %v1544 = vld [vmem:[%s6 + $0x38] sm:$0xff]
    %v1545 = vld [vmem:[%s6 + $0x40] sm:$0xff]
    %v1546 = vld [vmem:[%s6 + $0x48] sm:$0xff]
    %v1547 = vld [vmem:[%s6 + $0x50] sm:$0xff]
    %v1548 = vld [vmem:[%s6 + $0x58] sm:$0xff]
    %v1549 = vld [vmem:[%s6 + $0x60] sm:$0xff]
    %v1550 = vld [vmem:[%s6 + $0x68] sm:$0xff]
    %v1551 = vld [vmem:[%s6 + $0x70] sm:$0xff]
    %v1552 = vld [vmem:[%s6 + $0x78] sm:$0xff]
    %v1553 = vld [vmem:[%s6 + $0x80] sm:$0xff]
    %v1554 = vld [vmem:[%s6 + $0x88] sm:$0xff]
    %v1555 = vmul.f32 %v1519, %v1537
    %v1556 = vmul.f32 %v1520, %v1538
    %v1557 = vmul.f32 %v1521, %v1539
    %v1558 = vmul.f32 %v1522, %v1540
    %v1559 = vmul.f32 %v1523, %v1541
    %v1560 = vmul.f32 %v1524, %v1542
    %v1561 = vmul.f32 %v1525, %v1543
    %v1562 = vmul.f32 %v1526, %v1544
    %v1563 = vmul.f32 %v1527, %v1545
    %v1564 = vmul.f32 %v1528, %v1546
    %v1565 = vmul.f32 %v1529, %v1547
    %v1566 = vmul.f32 %v1530, %v1548
    %v1567 = vmul.f32 %v1531, %v1549
    %v1568 = vmul.f32 %v1532, %v1550
    %v1569 = vmul.f32 %v1533, %v1551
    %v1570 = vmul.f32 %v1534, %v1552
    %v1571 = vmul.f32 %v1535, %v1553
    %v1572 = vmul.f32 %v1536, %v1554
    %v1573 = vlaneseq
    %v1574 = vshrl.u32 %v1573, 7
    %v1575 = vsub.s32 6, %v1574
    %v1576 = vrot.slane %v40, %v1575
    %1577 = vmatprep.subr.mxu0 0.0
    %1578 = vmatpush1.msra.mxu0 %v1570
    %1579 = vmatprep.subr.mxu0 0.0
    %1580 = vmatpush1.msra.mxu0 %v1569
    %1581 = vmatprep.subr.mxu0 0.0
    %1582 = vmatpush1.msra.mxu0 %v1568
    %1583 = vmatprep.subr.mxu0 0.0
    %1584 = vmatpush1.msra.mxu0 %v1567
    %1585 = vmatprep.subr.mxu0 0.0
    %1586 = vmatpush1.msra.mxu0 %v1566
    %1587 = vmatprep.subr.mxu0 0.0
    %1588 = vmatpush1.msra.mxu0 %v1565
    %1589 = vmatprep.subr.mxu0 0.0
    %1590 = vmatpush1.msra.mxu0 %v1564
    %1591 = vmatprep.subr.mxu0 0.0
    %1592 = vmatpush1.msra.mxu0 %v1563
    %1593 = vmatprep.subr.mxu0 0.0
    %1594 = vmatpush1.msra.mxu0 %v1562
    %1595 = vmatprep.subr.mxu0 0.0
    %1596 = vmatpush1.msra.mxu0 %v1561
    %1597 = vmatprep.subr.mxu0 0.0
    %1598 = vmatpush1.msra.mxu0 %v1560
    %1599 = vmatprep.subr.mxu0 0.0
    %1600 = vmatpush1.msra.mxu0 %v1559
    %1601 = vmatprep.subr.mxu0 0.0
    %1602 = vmatpush1.msra.mxu0 %v1558
    %1603 = vmatprep.subr.mxu0 0.0
    %1604 = vmatpush1.msra.mxu0 %v1557
    %1605 = vmatprep.subr.mxu0 0.0
    %1606 = vmatpush1.msra.mxu0 %v1556
    %1607 = vmatprep.subr.mxu0 0.0
    %1608 = vmatpush1.msra.mxu0 %v1555
    %1609 = vmatprep.subr.mxu0 0.0
    %1610 = vmatpush2.msra.mxu0 0.0
    %1611 = vmatprep.subr.mxu0 0.0
    %1612 = vmatpush2.msra.mxu0 0.0
    %1613 = vmatprep.subr.mxu0 0.0
    %1614 = vmatpush2.msra.mxu0 0.0
    %1615 = vmatprep.subr.mxu0 0.0
    %1616 = vmatpush2.msra.mxu0 0.0
    %1617 = vmatprep.subr.mxu0 0.0
    %1618 = vmatpush2.msra.mxu0 0.0
    %1619 = vmatprep.subr.mxu0 0.0
    %1620 = vmatpush2.msra.mxu0 0.0
    %1621 = vmatprep.subr.mxu0 0.0
    %1622 = vmatpush2.msra.mxu0 0.0
    %1623 = vmatprep.subr.mxu0 0.0
    %1624 = vmatpush2.msra.mxu0 0.0
    %1625 = vmatprep.subr.mxu0 0.0
    %1626 = vmatpush2.msra.mxu0 0.0
    %1627 = vmatprep.subr.mxu0 0.0
    %1628 = vmatpush2.msra.mxu0 0.0
    %1629 = vmatprep.subr.mxu0 0.0
    %1630 = vmatpush2.msra.mxu0 0.0
    %1631 = vmatprep.subr.mxu0 0.0
    %1632 = vmatpush2.msra.mxu0 0.0
    %1633 = vmatprep.subr.mxu0 0.0
    %1634 = vmatpush2.msra.mxu0 0.0
    %1635 = vmatprep.subr.mxu0 0.0
    %1636 = vmatpush2.msra.mxu0 0.0
    %1637 = vmatprep.subr.mxu0 0.0
    %1638 = vmatpush2.msra.mxu0 %v1572
    %1639 = vmatprep.subr.mxu0 0.0
    %1640 = vmatpush2.msra.mxu0 %v1571
    %1641 = vmatprep.mubr.f32.mxu0 %v1308
    %1642 = vmatmul.mubr.f32.gmra.mxu0 %v472
    %v1643 = vpop.f32.mrf.mxu0
    %v1644 = vadd.f32 %v1576, %v1643
    %v1645 = vpop.f32.mrf.mxu0
    %1646 = vdwg.mxu0
    %vm1647 = vcmp.gt.f32.partialorder %v1644, 0.0
    %v1648 = vmul.f32 %v1644, 0.01
    %v1649 = vsel %vm1647, %v1644, %v1648
    %v1650 = vlaneseq
    %v1651 = vshrl.u32 %v1650, 7
    %v1652 = vsub.s32 7, %v1651
    %v1653 = vrot.slane %v40, %v1652
    %v1654 = vmul.f32 %v1649, %v1653
    %v1655 = vsel %vm339, %v1654, 0.0
    %1656 = vadd.xlane.f32.xlu0 %v1655
    %v1657 = vpop.xlane.xlu0 %1656
    %s1658 = sld [smem:[#allocation2 + $0x1]]
    %v1659 = vstv %s1658
    %v1660 = vadd.f32 %v1657, %v1659
    %vm1661 = vcmp.lt.s32.totalorder %v1033, 64
    %1663 = vset.pattern.permute.xlu0 0
    %1664 = vperm.xlu0 %1663, %v1440
    %v1665 = vpop.permute.xlu0 %1664
    %v1667 = vsel %vm1661, %v1660, %v1665
    %1668 = vst [vmem:[%s7] sm:$0xff] %v1667
    // Predicated region
    $region34: #{pdu_forward.1} parent=1 // pred_check
      _
    $region35: #{pdu_forward.1} parent=1 // pred_check_branch
      %1670 = sbr.rel (0) target = $region37
    $region36: #{pdu_forward.1} parent=1 // pred_region
      _
    $region37: #{pdu_forward.1} parent=1 // pred_fallthru
      _
    // Predicated region
    $region38: #{pdu_forward.1} parent=1 // pred_check
      _
    $region39: #{pdu_forward.1} parent=1 // pred_check_branch
      %1672 = sbr.rel (0) target = $region41
    $region40: #{pdu_forward.1} parent=1 // pred_region
      _
    $region41: #{pdu_forward.1} parent=1 // pred_fallthru
      _
    %1673 = vsyncpa [#allocation3], 1

</llo_original>
